<compile_context>
chip_gen: v7x
topology: tpu7x:2x2x1
jax: 0.10.0
libtpu: 0.0.40
codegen_flags: <defaults>
</compile_context>

<pallas_src>
import functools

import jax
import jax.numpy as jnp
from jax.experimental import pallas as pl
from jax.experimental.pallas import tpu as pltpu

BN_EPS = 1e-5


# ---------------------------------------------------------------------------
# In-kernel selector generation (iota + compares; no div, no HBM operands)
# ---------------------------------------------------------------------------

def _pool_selectors(off, hw, H, W, dtype):
    """sh[j,h]=1 iff flat index off+j lies in spatial row h; sw[j,w]=1 iff col w."""
    j = jax.lax.broadcasted_iota(jnp.int32, (hw, 1), 0) + off           # (hw, 1)
    hstart = jax.lax.broadcasted_iota(jnp.int32, (1, H), 1) * W         # (1, H)
    ge = (j >= hstart).astype(jnp.float32)                               # (hw, H)
    lt = (j < hstart + W).astype(jnp.float32)
    sh = ge * lt                                                         # one-hot(h)
    hval = jnp.sum(ge, axis=1, keepdims=True) - 1.0                      # (hw, 1) == h
    wval = j.astype(jnp.float32) - float(W) * hval                       # (hw, 1) == w
    wcols = jax.lax.broadcasted_iota(jnp.int32, (1, W), 1).astype(jnp.float32)
    sw = (wval == wcols).astype(jnp.float32)                             # one-hot(w)
    return sh.astype(dtype), sw.astype(dtype)


def _bcast_selectors(off, hw, H, W, dtype):
    """Transposed selectors for the gate broadcast: shT (H, hw), swT (W, hw)."""
    j = jax.lax.broadcasted_iota(jnp.int32, (1, hw), 1) + off            # (1, hw)
    hstart = jax.lax.broadcasted_iota(jnp.int32, (H, 1), 0) * W          # (H, 1)
    ge = (j >= hstart).astype(jnp.float32)                               # (H, hw)
    lt = (j < hstart + W).astype(jnp.float32)
    shT = ge * lt
    hval = jnp.sum(ge, axis=0, keepdims=True) - 1.0                      # (1, hw)
    wval = j.astype(jnp.float32) - float(W) * hval                       # (1, hw)
    wrows = jax.lax.broadcasted_iota(jnp.int32, (W, 1), 0).astype(jnp.float32)
    swT = (wval == wrows).astype(jnp.float32)                            # (W, hw)
    return shT.astype(dtype), swT.astype(dtype)


# ---------------------------------------------------------------------------
# Kernel bodies
# ---------------------------------------------------------------------------

def _gate_branch(xp, w1, b1, w_gate, b_gate):
    """conv1 (BN folded) -> h_swish -> conv -> sigmoid on one pooled branch."""
    z = jnp.dot(w1, xp, preferred_element_type=jnp.float32) + b1
    z = z * (jnp.clip(z + 3.0, 0.0, 6.0) * (1.0 / 6.0))                  # h_swish
    return jax.nn.sigmoid(
        jnp.dot(w_gate, z, preferred_element_type=jnp.float32) + b_gate)


def coord_att_fused_kernel(x_ref, w1_ref, b1_ref, w2_ref, b2_ref, w3_ref, b3_ref,
                           o_ref, *, H, W):
    """One batch element per grid step; fully lane-dense over the flat HW axis."""
    x = x_ref[...]                                                        # (C, HW)
    HW = x.shape[-1]

    # Coordinate pooling via selector matmuls (MXU; no reshape / concat / split).
    sh, sw = _pool_selectors(0, HW, H, W, x.dtype)
    x_h = jnp.dot(x, sh, preferred_element_type=jnp.float32) * (1.0 / W)  # (C, H)
    x_w = jnp.dot(x, sw, preferred_element_type=jnp.float32) * (1.0 / H)  # (C, W)

    a_h = _gate_branch(x_h, w1_ref[...], b1_ref[...], w2_ref[...], b2_ref[...])
    a_w = _gate_branch(x_w, w1_ref[...], b1_ref[...], w3_ref[...], b3_ref[...])

    # Broadcast gates back onto the flat HW axis (stays lane-dense for the store).
    shT, swT = _bcast_selectors(0, HW, H, W, jnp.float32)
    gate = (jnp.dot(a_h, shT, preferred_element_type=jnp.float32) *
            jnp.dot(a_w, swT, preferred_element_type=jnp.float32))        # (C, HW)

    o_ref[...] = (x * gate.astype(x.dtype)).astype(o_ref.dtype)


def coord_att_gate_kernel(x_ref, w1_ref, b1_ref, w2_ref, b2_ref, w3_ref, b3_ref,
                          gh_ref, gw_ref, sum_h, sum_w, *, H, W):
    """Tiled path, pass 1: accumulate pooling over HW tiles, emit per-batch gates."""
    t = pl.program_id(1)

    @pl.when(t == 0)
    def _():
        sum_h[...] = jnp.zeros_like(sum_h)
        sum_w[...] = jnp.zeros_like(sum_w)

    x = x_ref[...]                                                        # (C, thw)
    thw = x.shape[-1]
    sh, sw = _pool_selectors(t * thw, thw, H, W, x.dtype)
    sum_h[...] += jnp.dot(x, sh, preferred_element_type=jnp.float32)
    sum_w[...] += jnp.dot(x, sw, preferred_element_type=jnp.float32)

    @pl.when(t == pl.num_programs(1) - 1)
    def _():
        x_h = sum_h[...] * (1.0 / W)
        x_w = sum_w[...] * (1.0 / H)
        gh_ref[...] = _gate_branch(x_h, w1_ref[...], b1_ref[...],
                                   w2_ref[...], b2_ref[...]).astype(gh_ref.dtype)
        gw_ref[...] = _gate_branch(x_w, w1_ref[...], b1_ref[...],
                                   w3_ref[...], b3_ref[...]).astype(gw_ref.dtype)


def coord_att_apply_kernel(x_ref, gh_ref, gw_ref, o_ref, *, H, W):
    """Tiled path, pass 2: lane-dense re-weighting of one HW tile."""
    x = x_ref[...]                                                        # (C, thw)
    thw = x.shape[-1]
    shT, swT = _bcast_selectors(pl.program_id(1) * thw, thw, H, W, jnp.float32)
    gate = (jnp.dot(gh_ref[...], shT, preferred_element_type=jnp.float32) *
            jnp.dot(gw_ref[...], swT, preferred_element_type=jnp.float32))
    o_ref[...] = (x * gate.astype(x.dtype)).astype(o_ref.dtype)


# ---------------------------------------------------------------------------
# Wrapper helpers
# ---------------------------------------------------------------------------

def _full_spec(arr, grid_ndim):
    zeros = (0,) * arr.ndim
    if grid_ndim == 1:
        return pl.BlockSpec(arr.shape, lambda n, _z=zeros: _z)
    return pl.BlockSpec(arr.shape, lambda n, t, _z=zeros: _z)


def _clamp_vmem(nbytes):
    # Stay comfortably under v7x's 64 MiB physical VMEM; never below 16 MiB.
    return int(min(max(nbytes, 16 << 20), 48 << 20))


def _pick_hw_tile(hw, target):
    """Largest multiple of 128 that divides hw and is <= target (or None)."""
    best = None
    d = 128
    limit = min(hw, max(target, 128))
    while d <= limit:
        if hw % d == 0:
            best = d
        d += 128
    return best


def _cost(flops, transcendentals, bytes_accessed):
    return pl.CostEstimate(flops=int(flops), transcendentals=int(transcendentals),
                           bytes_accessed=int(bytes_accessed))


# ---------------------------------------------------------------------------
# Pallas call wrappers
# ---------------------------------------------------------------------------

def _coord_att_fused(x_flat, folded, H, W, out_dtype, cost):
    N, C, HW = x_flat.shape
    w1e, b1e, w2, b2, w3, b3 = folded
    itemsize = jnp.dtype(x_flat.dtype).itemsize

    slab_b = C * HW * itemsize
    vmem = _clamp_vmem(4 * slab_b + 3 * C * HW * 4 + 3 * HW * (H + W) * 4 + (4 << 20))

    kern = functools.partial(coord_att_fused_kernel, H=H, W=W)
    x_spec = pl.BlockSpec((pl.Squeezed(), C, HW), lambda n: (n, 0, 0))
    o_spec = pl.BlockSpec((pl.Squeezed(), C, HW), lambda n: (n, 0, 0))

    return pl.pallas_call(
        kern,
        out_shape=jax.ShapeDtypeStruct((N, C, HW), out_dtype),
        grid_spec=pltpu.PrefetchScalarGridSpec(
            num_scalar_prefetch=0,
            grid=(N,),
            in_specs=[x_spec] + [_full_spec(a, 1)
                                 for a in (w1e, b1e, w2, b2, w3, b3)],
            out_specs=o_spec,
        ),
        compiler_params=pltpu.CompilerParams(
            dimension_semantics=("parallel",),
            vmem_limit_bytes=vmem),
        cost_estimate=cost,
    )(x_flat, w1e, b1e, w2, b2, w3, b3)


def _coord_att_tiled(x_flat, folded, H, W, thw, out_dtype, cost_gate, cost_apply):
    N, C, HW = x_flat.shape
    T = HW // thw
    w1e, b1e, w2, b2, w3, b3 = folded
    itemsize = jnp.dtype(x_flat.dtype).itemsize

    tile_b = C * thw * itemsize
    sel_b = 3 * thw * (H + W) * 4
    gate_b = C * (H + W) * 4

    # Pass 1: pooled sums accumulated in VMEM scratch; gates written on last tile.
    gate_vmem = _clamp_vmem(2 * tile_b + sel_b + 6 * gate_b + (4 << 20))
    gate_kern = functools.partial(coord_att_gate_kernel, H=H, W=W)
    gate_h, gate_w = pl.pallas_call(
        gate_kern,
        out_shape=(jax.ShapeDtypeStruct((N, C, H), jnp.float32),
                   jax.ShapeDtypeStruct((N, C, W), jnp.float32)),
        grid_spec=pltpu.PrefetchScalarGridSpec(
            num_scalar_prefetch=0,
            grid=(N, T),
            in_specs=[
                pl.BlockSpec((pl.Squeezed(), C, thw), lambda n, t: (n, 0, t)),
                _full_spec(w1e, 2), _full_spec(b1e, 2),
                _full_spec(w2, 2), _full_spec(b2, 2),
                _full_spec(w3, 2), _full_spec(b3, 2),
            ],
            out_specs=[
                pl.BlockSpec((pl.Squeezed(), C, H), lambda n, t: (n, 0, 0)),
                pl.BlockSpec((pl.Squeezed(), C, W), lambda n, t: (n, 0, 0)),
            ],
            scratch_shapes=[pltpu.VMEM((C, H), jnp.float32),
                            pltpu.VMEM((C, W), jnp.float32)],
        ),
        compiler_params=pltpu.CompilerParams(
            dimension_semantics=("parallel", "arbitrary"),
            vmem_limit_bytes=gate_vmem),
        cost_estimate=cost_gate,
    )(x_flat, w1e, b1e, w2, b2, w3, b3)

    # Pass 2: lane-dense per-tile re-weighting (fully parallel grid).
    apply_vmem = _clamp_vmem(4 * tile_b + sel_b + 2 * gate_b
                             + 3 * C * thw * 4 + (4 << 20))
    apply_kern = functools.partial(coord_att_apply_kernel, H=H, W=W)
    out_flat = pl.pallas_call(
        apply_kern,
        out_shape=jax.ShapeDtypeStruct((N, C, HW), out_dtype),
        grid_spec=pltpu.PrefetchScalarGridSpec(
            num_scalar_prefetch=0,
            grid=(N, T),
            in_specs=[
                pl.BlockSpec((pl.Squeezed(), C, thw), lambda n, t: (n, 0, t)),
                pl.BlockSpec((pl.Squeezed(), C, H), lambda n, t: (n, 0, 0)),
                pl.BlockSpec((pl.Squeezed(), C, W), lambda n, t: (n, 0, 0)),
            ],
            out_specs=pl.BlockSpec((pl.Squeezed(), C, thw),
                                   lambda n, t: (n, 0, t)),
        ),
        compiler_params=pltpu.CompilerParams(
            dimension_semantics=("parallel", "parallel"),
            vmem_limit_bytes=apply_vmem),
        cost_estimate=cost_apply,
    )(x_flat, gate_h, gate_w)
    return out_flat


def coord_att(x, params, *, force_tiled=False, hw_tile_target=4096):
    """x: (N, C, H, W); params: (w1, b1, gamma, beta, rmean, rvar, w2, b2, w3, b3)."""
    N, C, H, W = x.shape
    HW = H * W
    w1, b1, g, be, rm, rv, w2, b2, w3, b3 = params
    if w1.shape[1] != C or w2.shape[0] != C or w3.shape[0] != C:
        raise ValueError("CoordAtt re-weighting requires oup == inp == C")

    # Fold BatchNorm (eval-mode running stats) and conv1 bias into conv1.
    # TODO(synk): PyTorch training-mode BN (batch statistics) is not reproduced.
    scale = g / jnp.sqrt(rv + BN_EPS)                       # (mip, 1)
    w1e = w1 * scale
    b1e = (b1 - rm) * scale + be
    folded = (w1e, b1e, w2, b2, w3, b3)
    mip = w1e.shape[0]

    # Lane-dense flat layout: trailing axis is H*W.
    x_flat = x.reshape(N, C, HW)
    itemsize = jnp.dtype(x.dtype).itemsize

    pool_fl = 2 * N * C * HW * (H + W)
    gate_fl = 2 * N * (mip * C * (H + W) + 2 * C * mip * (H + W))
    bcast_fl = 2 * N * C * HW * (H + W)
    trans = N * C * (H + W)
    slab_bytes = N * C * HW * itemsize
    cost_fused = _cost(pool_fl + gate_fl + bcast_fl + 2 * N * C * HW, trans,
                       2 * slab_bytes)
    cost_gate = _cost(pool_fl + gate_fl, trans, slab_bytes)
    cost_apply = _cost(bcast_fl + 2 * N * C * HW, 0,
                       2 * slab_bytes + N * C * (H + W) * 4)

    slab_b = C * HW * itemsize
    fused_need = 4 * slab_b + 3 * C * HW * 4 + 3 * HW * (H + W) * 4
    want_tiled = force_tiled or fused_need > (28 << 20)
    thw = _pick_hw_tile(HW, hw_tile_target) if want_tiled else None

    if thw is not None and thw < HW:
        out_flat = _coord_att_tiled(x_flat, folded, H, W, thw, x.dtype,
                                    cost_gate, cost_apply)
    else:
        # TODO(synk): if H*W has no multiple-of-128 divisor, very large slabs fall
        # back to the full-slab fused path instead of an H-tiled (lane=W) variant.
        out_flat = _coord_att_fused(x_flat, folded, H, W, x.dtype, cost_fused)
    return out_flat.reshape(N, C, H, W)


# ---------------------------------------------------------------------------
# Parameters + pure-JAX reference
# ---------------------------------------------------------------------------

def make_params(key, inp, oup, groups=32):
    mip = max(8, inp // groups)
    ks = jax.random.split(key, 10)
    w1 = 0.1 * jax.random.normal(ks[0], (mip, inp), jnp.float32)   # conv1 weight (1x1)
    b1 = 0.01 * jax.random.normal(ks[1], (mip, 1), jnp.float32)    # conv1 bias
    gamma = 1.0 + 0.1 * jax.random.normal(ks[2], (mip, 1), jnp.float32)
    beta = 0.1 * jax.random.normal(ks[3], (mip, 1), jnp.float32)
    rmean = 0.1 * jax.random.normal(ks[4], (mip, 1), jnp.float32)
    rvar = 0.5 + jax.random.uniform(ks[5], (mip, 1), jnp.float32)
    w2 = 0.1 * jax.random.normal(ks[6], (oup, mip), jnp.float32)   # conv2 weight
    b2 = 0.01 * jax.random.normal(ks[7], (oup, 1), jnp.float32)    # conv2 bias
    w3 = 0.1 * jax.random.normal(ks[8], (oup, mip), jnp.float32)   # conv3 weight
    b3 = 0.01 * jax.random.normal(ks[9], (oup, 1), jnp.float32)    # conv3 bias
    return (w1, b1, gamma, beta, rmean, rvar, w2, b2, w3, b3)


def coord_att_ref(x, params):
    """Pure-JAX reference for correctness checking."""
    w1, b1, g, be, rm, rv, w2, b2, w3, b3 = params
    N, C, H, W = x.shape
    xh = x.mean(axis=3)                                    # (N, C, H)
    xw = x.mean(axis=2)                                    # (N, C, W)
    y = jnp.concatenate([xh, xw], axis=2)                  # (N, C, H+W)
    z = jnp.einsum('mc,nck->nmk', w1, y) + b1[None]
    z = (z - rm[None]) / jnp.sqrt(rv[None] + BN_EPS) * g[None] + be[None]
    z = z * jnp.clip(z + 3.0, 0.0, 6.0) / 6.0
    zh, zw = z[:, :, :H], z[:, :, H:]
    ah = jax.nn.sigmoid(jnp.einsum('om,nmk->nok', w2, zh) + b2[None])  # (N, oup, H)
    aw = jax.nn.sigmoid(jnp.einsum('om,nmk->nok', w3, zw) + b3[None])  # (N, oup, W)
    return x * aw[:, :, None, :] * ah[:, :, :, None]


if __name__ == "__main__":
    N, C, H, W = 2, 4, 16, 16      # inp == oup == C (required by identity * gates)
    key = jax.random.PRNGKey(0)
    kx, kp = jax.random.split(key)
    x = jax.random.normal(kx, (N, C, H, W), jnp.float32)
    params = make_params(kp, inp=C, oup=C, groups=32)

    ref = coord_att_ref(x, params)

    # Fused single-slab path (the one selected for these small shapes).
    out = jax.block_until_ready(coord_att(x, params))
    assert out.shape == (N, C, H, W)
    assert jnp.allclose(out, ref, atol=1e-5, rtol=1e-5), "fused path mismatch"

    # Exercise the VMEM-aware tiled path (used for large slabs on v7x/v5e) too.
    out_tiled = jax.block_until_ready(
        coord_att(x, params, force_tiled=True, hw_tile_target=128))
    assert jnp.allclose(out_tiled, ref, atol=1e-5, rtol=1e-5), "tiled path mismatch"

    print("KERNEL_OK")
</pallas_src>

<mosaic_0001>
module attributes {stable_mosaic.version = 11 : i64} {
  func.func @coord_att_fused_kernel(%arg0: i32, %arg1: memref<1x4x256xf32, #tpu.memory_space<vmem>>, %arg2: memref<8x4xf32, #tpu.memory_space<vmem>>, %arg3: memref<8x1xf32, #tpu.memory_space<vmem>>, %arg4: memref<4x8xf32, #tpu.memory_space<vmem>>, %arg5: memref<4x1xf32, #tpu.memory_space<vmem>>, %arg6: memref<4x8xf32, #tpu.memory_space<vmem>>, %arg7: memref<4x1xf32, #tpu.memory_space<vmem>>, %arg8: memref<1x4x256xf32, #tpu.memory_space<vmem>>) attributes {dimension_semantics = [#tpu.dimension_semantics<parallel>], iteration_bounds = array<i64: 2>, scalar_prefetch = 0 : i64, scratch_operands = 0 : i64, tpu.core_type = #tpu.core_type<tc>, window_params = [{transform_indices = @transform_0, window_bounds = array<i64: 1, 4, 256>}, {pipeline_mode = #tpu.pipeline_mode<synchronous>, transform_indices = @transform_1, window_bounds = array<i64: 8, 4>}, {pipeline_mode = #tpu.pipeline_mode<synchronous>, transform_indices = @transform_2, window_bounds = array<i64: 8, 1>}, {pipeline_mode = #tpu.pipeline_mode<synchronous>, transform_indices = @transform_3, window_bounds = array<i64: 4, 8>}, {pipeline_mode = #tpu.pipeline_mode<synchronous>, transform_indices = @transform_4, window_bounds = array<i64: 4, 1>}, {pipeline_mode = #tpu.pipeline_mode<synchronous>, transform_indices = @transform_5, window_bounds = array<i64: 4, 8>}, {pipeline_mode = #tpu.pipeline_mode<synchronous>, transform_indices = @transform_6, window_bounds = array<i64: 4, 1>}, {transform_indices = @transform_7, window_bounds = array<i64: 1, 4, 256>}]} {
    %c0 = arith.constant 0 : index
    %c0_0 = arith.constant 0 : index
    %c0_1 = arith.constant 0 : index
    %0 = vector.load %arg1[%c0, %c0_0, %c0_1] : memref<1x4x256xf32, #tpu.memory_space<vmem>>, vector<1x4x256xf32>
    %1 = vector.shape_cast %0 : vector<1x4x256xf32> to vector<4x256xf32>
    %2 = tpu.iota {dimensions = array<i32: 0>} : vector<256x1xi32>
    %c0_i32 = arith.constant 0 : i32
    %3 = vector.broadcast %c0_i32 : i32 to vector<256x1xi32>
    %4 = arith.addi %2, %3 : vector<256x1xi32>
    %5 = tpu.iota {dimensions = array<i32: 1>} : vector<1x16xi32>
    %c16_i32 = arith.constant 16 : i32
    %6 = vector.broadcast %c16_i32 : i32 to vector<1x16xi32>
    %7 = arith.muli %5, %6 : vector<1x16xi32>
    %8 = vector.broadcast %4 : vector<256x1xi32> to vector<256x16xi32>
    %9 = vector.broadcast %7 : vector<1x16xi32> to vector<256x16xi32>
    %10 = arith.cmpi sge, %8, %9 : vector<256x16xi32>
    %11 = arith.extui %10 : vector<256x16xi1> to vector<256x16xi32>
    %12 = arith.sitofp %11 : vector<256x16xi32> to vector<256x16xf32>
    %c16_i32_2 = arith.constant 16 : i32
    %13 = vector.broadcast %c16_i32_2 : i32 to vector<1x16xi32>
    %14 = arith.addi %7, %13 : vector<1x16xi32>
    %15 = vector.broadcast %4 : vector<256x1xi32> to vector<256x16xi32>
    %16 = vector.broadcast %14 : vector<1x16xi32> to vector<256x16xi32>
    %17 = arith.cmpi slt, %15, %16 : vector<256x16xi32>
    %18 = arith.extui %17 : vector<256x16xi1> to vector<256x16xi32>
    %19 = arith.sitofp %18 : vector<256x16xi32> to vector<256x16xf32>
    %20 = arith.mulf %12, %19 : vector<256x16xf32>
    %cst = arith.constant dense<0.000000e+00> : vector<256xf32>
    %21 = vector.multi_reduction <add>, %12, %cst [1] : vector<256x16xf32> to vector<256xf32>
    %22 = vector.shape_cast %21 : vector<256xf32> to vector<256x1xf32>
    %cst_3 = arith.constant 1.000000e+00 : f32
    %23 = vector.broadcast %cst_3 : f32 to vector<256x1xf32>
    %24 = arith.subf %22, %23 : vector<256x1xf32>
    %25 = arith.sitofp %4 : vector<256x1xi32> to vector<256x1xf32>
    %cst_4 = arith.constant 1.600000e+01 : f32
    %26 = vector.broadcast %cst_4 : f32 to vector<256x1xf32>
    %27 = arith.mulf %26, %24 : vector<256x1xf32>
    %28 = arith.subf %25, %27 : vector<256x1xf32>
    %29 = tpu.iota {dimensions = array<i32: 1>} : vector<1x16xi32>
    %30 = arith.sitofp %29 : vector<1x16xi32> to vector<1x16xf32>
    %31 = vector.broadcast %28 : vector<256x1xf32> to vector<256x16xf32>
    %32 = vector.broadcast %30 : vector<1x16xf32> to vector<256x16xf32>
    %33 = arith.cmpf oeq, %31, %32 : vector<256x16xf32>
    %34 = arith.extui %33 : vector<256x16xi1> to vector<256x16xi32>
    %35 = arith.sitofp %34 : vector<256x16xi32> to vector<256x16xf32>
    %cst_5 = arith.constant dense<0.000000e+00> : vector<4x16xf32>
    %36 = tpu.matmul %1, %20, %cst_5 {dimension_numbers = #tpu.dot_dimension_numbers<[1], [0], [0], [1], [0, 0, 1, 1], [], []>} : vector<4x256xf32>, vector<256x16xf32>, vector<4x16xf32> -> vector<4x16xf32>
    %cst_6 = arith.constant 6.250000e-02 : f32
    %37 = vector.broadcast %cst_6 : f32 to vector<4x16xf32>
    %38 = arith.mulf %36, %37 : vector<4x16xf32>
    %cst_7 = arith.constant dense<0.000000e+00> : vector<4x16xf32>
    %39 = tpu.matmul %1, %35, %cst_7 {dimension_numbers = #tpu.dot_dimension_numbers<[1], [0], [0], [1], [0, 0, 1, 1], [], []>} : vector<4x256xf32>, vector<256x16xf32>, vector<4x16xf32> -> vector<4x16xf32>
    %cst_8 = arith.constant 6.250000e-02 : f32
    %40 = vector.broadcast %cst_8 : f32 to vector<4x16xf32>
    %41 = arith.mulf %39, %40 : vector<4x16xf32>
    %c0_9 = arith.constant 0 : index
    %c0_10 = arith.constant 0 : index
    %42 = vector.load %arg2[%c0_9, %c0_10] : memref<8x4xf32, #tpu.memory_space<vmem>>, vector<8x4xf32>
    %c0_11 = arith.constant 0 : index
    %c0_12 = arith.constant 0 : index
    %43 = vector.load %arg3[%c0_11, %c0_12] : memref<8x1xf32, #tpu.memory_space<vmem>>, vector<8x1xf32>
    %c0_13 = arith.constant 0 : index
    %c0_14 = arith.constant 0 : index
    %44 = vector.load %arg4[%c0_13, %c0_14] : memref<4x8xf32, #tpu.memory_space<vmem>>, vector<4x8xf32>
    %c0_15 = arith.constant 0 : index
    %c0_16 = arith.constant 0 : index
    %45 = vector.load %arg5[%c0_15, %c0_16] : memref<4x1xf32, #tpu.memory_space<vmem>>, vector<4x1xf32>
    %cst_17 = arith.constant dense<0.000000e+00> : vector<8x16xf32>
    %46 = tpu.matmul %42, %38, %cst_17 {dimension_numbers = #tpu.dot_dimension_numbers<[1], [0], [0], [1], [0, 0, 1, 1], [], []>} : vector<8x4xf32>, vector<4x16xf32>, vector<8x16xf32> -> vector<8x16xf32>
    %47 = vector.broadcast %43 : vector<8x1xf32> to vector<8x16xf32>
    %48 = arith.addf %46, %47 : vector<8x16xf32>
    %cst_18 = arith.constant 3.000000e+00 : f32
    %49 = vector.broadcast %cst_18 : f32 to vector<8x16xf32>
    %50 = arith.addf %48, %49 : vector<8x16xf32>
    %cst_19 = arith.constant 0.000000e+00 : f32
    %cst_20 = arith.constant 6.000000e+00 : f32
    %51 = vector.broadcast %cst_19 : f32 to vector<8x16xf32>
    %52 = arith.maximumf %51, %50 : vector<8x16xf32>
    %53 = vector.broadcast %cst_20 : f32 to vector<8x16xf32>
    %54 = arith.minimumf %53, %52 : vector<8x16xf32>
    %cst_21 = arith.constant 0.166666672 : f32
    %55 = vector.broadcast %cst_21 : f32 to vector<8x16xf32>
    %56 = arith.mulf %54, %55 : vector<8x16xf32>
    %57 = arith.mulf %48, %56 : vector<8x16xf32>
    %cst_22 = arith.constant dense<0.000000e+00> : vector<4x16xf32>
    %58 = tpu.matmul %44, %57, %cst_22 {dimension_numbers = #tpu.dot_dimension_numbers<[1], [0], [0], [1], [0, 0, 1, 1], [], []>} : vector<4x8xf32>, vector<8x16xf32>, vector<4x16xf32> -> vector<4x16xf32>
    %59 = vector.broadcast %45 : vector<4x1xf32> to vector<4x16xf32>
    %60 = arith.addf %58, %59 : vector<4x16xf32>
    %61 = arith.negf %60 : vector<4x16xf32>
    %62 = math.exp %61 : vector<4x16xf32>
    %cst_23 = arith.constant 1.000000e+00 : f32
    %63 = vector.broadcast %cst_23 : f32 to vector<4x16xf32>
    %64 = arith.addf %63, %62 : vector<4x16xf32>
    %65 = arith.divf %63, %64 : vector<4x16xf32>
    %c0_24 = arith.constant 0 : index
    %c0_25 = arith.constant 0 : index
    %66 = vector.load %arg2[%c0_24, %c0_25] : memref<8x4xf32, #tpu.memory_space<vmem>>, vector<8x4xf32>
    %c0_26 = arith.constant 0 : index
    %c0_27 = arith.constant 0 : index
    %67 = vector.load %arg3[%c0_26, %c0_27] : memref<8x1xf32, #tpu.memory_space<vmem>>, vector<8x1xf32>
    %c0_28 = arith.constant 0 : index
    %c0_29 = arith.constant 0 : index
    %68 = vector.load %arg6[%c0_28, %c0_29] : memref<4x8xf32, #tpu.memory_space<vmem>>, vector<4x8xf32>
    %c0_30 = arith.constant 0 : index
    %c0_31 = arith.constant 0 : index
    %69 = vector.load %arg7[%c0_30, %c0_31] : memref<4x1xf32, #tpu.memory_space<vmem>>, vector<4x1xf32>
    %cst_32 = arith.constant dense<0.000000e+00> : vector<8x16xf32>
    %70 = tpu.matmul %66, %41, %cst_32 {dimension_numbers = #tpu.dot_dimension_numbers<[1], [0], [0], [1], [0, 0, 1, 1], [], []>} : vector<8x4xf32>, vector<4x16xf32>, vector<8x16xf32> -> vector<8x16xf32>
    %71 = vector.broadcast %67 : vector<8x1xf32> to vector<8x16xf32>
    %72 = arith.addf %70, %71 : vector<8x16xf32>
    %cst_33 = arith.constant 3.000000e+00 : f32
    %73 = vector.broadcast %cst_33 : f32 to vector<8x16xf32>
    %74 = arith.addf %72, %73 : vector<8x16xf32>
    %cst_34 = arith.constant 0.000000e+00 : f32
    %cst_35 = arith.constant 6.000000e+00 : f32
    %75 = vector.broadcast %cst_34 : f32 to vector<8x16xf32>
    %76 = arith.maximumf %75, %74 : vector<8x16xf32>
    %77 = vector.broadcast %cst_35 : f32 to vector<8x16xf32>
    %78 = arith.minimumf %77, %76 : vector<8x16xf32>
    %cst_36 = arith.constant 0.166666672 : f32
    %79 = vector.broadcast %cst_36 : f32 to vector<8x16xf32>
    %80 = arith.mulf %78, %79 : vector<8x16xf32>
    %81 = arith.mulf %72, %80 : vector<8x16xf32>
    %cst_37 = arith.constant dense<0.000000e+00> : vector<4x16xf32>
    %82 = tpu.matmul %68, %81, %cst_37 {dimension_numbers = #tpu.dot_dimension_numbers<[1], [0], [0], [1], [0, 0, 1, 1], [], []>} : vector<4x8xf32>, vector<8x16xf32>, vector<4x16xf32> -> vector<4x16xf32>
    %83 = vector.broadcast %69 : vector<4x1xf32> to vector<4x16xf32>
    %84 = arith.addf %82, %83 : vector<4x16xf32>
    %85 = arith.negf %84 : vector<4x16xf32>
    %86 = math.exp %85 : vector<4x16xf32>
    %cst_38 = arith.constant 1.000000e+00 : f32
    %87 = vector.broadcast %cst_38 : f32 to vector<4x16xf32>
    %88 = arith.addf %87, %86 : vector<4x16xf32>
    %89 = arith.divf %87, %88 : vector<4x16xf32>
    %90 = tpu.iota {dimensions = array<i32: 1>} : vector<1x256xi32>
    %c0_i32_39 = arith.constant 0 : i32
    %91 = vector.broadcast %c0_i32_39 : i32 to vector<1x256xi32>
    %92 = arith.addi %90, %91 : vector<1x256xi32>
    %93 = tpu.iota {dimensions = array<i32: 0>} : vector<16x1xi32>
    %c16_i32_40 = arith.constant 16 : i32
    %94 = vector.broadcast %c16_i32_40 : i32 to vector<16x1xi32>
    %95 = arith.muli %93, %94 : vector<16x1xi32>
    %96 = vector.broadcast %92 : vector<1x256xi32> to vector<16x256xi32>
    %97 = vector.broadcast %95 : vector<16x1xi32> to vector<16x256xi32>
    %98 = arith.cmpi sge, %96, %97 : vector<16x256xi32>
    %99 = arith.extui %98 : vector<16x256xi1> to vector<16x256xi32>
    %100 = arith.sitofp %99 : vector<16x256xi32> to vector<16x256xf32>
    %c16_i32_41 = arith.constant 16 : i32
    %101 = vector.broadcast %c16_i32_41 : i32 to vector<16x1xi32>
    %102 = arith.addi %95, %101 : vector<16x1xi32>
    %103 = vector.broadcast %92 : vector<1x256xi32> to vector<16x256xi32>
    %104 = vector.broadcast %102 : vector<16x1xi32> to vector<16x256xi32>
    %105 = arith.cmpi slt, %103, %104 : vector<16x256xi32>
    %106 = arith.extui %105 : vector<16x256xi1> to vector<16x256xi32>
    %107 = arith.sitofp %106 : vector<16x256xi32> to vector<16x256xf32>
    %108 = arith.mulf %100, %107 : vector<16x256xf32>
    %cst_42 = arith.constant dense<0.000000e+00> : vector<256xf32>
    %109 = vector.multi_reduction <add>, %100, %cst_42 [0] : vector<16x256xf32> to vector<256xf32>
    %110 = vector.shape_cast %109 : vector<256xf32> to vector<1x256xf32>
    %cst_43 = arith.constant 1.000000e+00 : f32
    %111 = vector.broadcast %cst_43 : f32 to vector<1x256xf32>
    %112 = arith.subf %110, %111 : vector<1x256xf32>
    %113 = arith.sitofp %92 : vector<1x256xi32> to vector<1x256xf32>
    %cst_44 = arith.constant 1.600000e+01 : f32
    %114 = vector.broadcast %cst_44 : f32 to vector<1x256xf32>
    %115 = arith.mulf %114, %112 : vector<1x256xf32>
    %116 = arith.subf %113, %115 : vector<1x256xf32>
    %117 = tpu.iota {dimensions = array<i32: 0>} : vector<16x1xi32>
    %118 = arith.sitofp %117 : vector<16x1xi32> to vector<16x1xf32>
    %119 = vector.broadcast %116 : vector<1x256xf32> to vector<16x256xf32>
    %120 = vector.broadcast %118 : vector<16x1xf32> to vector<16x256xf32>
    %121 = arith.cmpf oeq, %119, %120 : vector<16x256xf32>
    %122 = arith.extui %121 : vector<16x256xi1> to vector<16x256xi32>
    %123 = arith.sitofp %122 : vector<16x256xi32> to vector<16x256xf32>
    %cst_45 = arith.constant dense<0.000000e+00> : vector<4x256xf32>
    %124 = tpu.matmul %65, %108, %cst_45 {dimension_numbers = #tpu.dot_dimension_numbers<[1], [0], [0], [1], [0, 0, 1, 1], [], []>} : vector<4x16xf32>, vector<16x256xf32>, vector<4x256xf32> -> vector<4x256xf32>
    %cst_46 = arith.constant dense<0.000000e+00> : vector<4x256xf32>
    %125 = tpu.matmul %89, %123, %cst_46 {dimension_numbers = #tpu.dot_dimension_numbers<[1], [0], [0], [1], [0, 0, 1, 1], [], []>} : vector<4x16xf32>, vector<16x256xf32>, vector<4x256xf32> -> vector<4x256xf32>
    %126 = arith.mulf %124, %125 : vector<4x256xf32>
    %127 = arith.mulf %1, %126 : vector<4x256xf32>
    %c0_47 = arith.constant 0 : index
    %c0_48 = arith.constant 0 : index
    %c0_49 = arith.constant 0 : index
    %128 = vector.load %arg8[%c0_47, %c0_48, %c0_49] : memref<1x4x256xf32, #tpu.memory_space<vmem>>, vector<1x4x256xf32>
    %129 = vector.shape_cast %128 : vector<1x4x256xf32> to vector<4x256xf32>
    %130 = vector.shape_cast %127 : vector<4x256xf32> to vector<1x4x256xf32>
    tpu.vector_store %arg8[%c0_47, %c0_48, %c0_49], %130 {strides = array<i32>} : memref<1x4x256xf32, #tpu.memory_space<vmem>>, vector<1x4x256xf32>,
    return
  }
  func.func @transform_0(%arg0: i32) -> (i32, i32, i32) {
    %c0_i32 = arith.constant 0 : i32
    %c0_i32_0 = arith.constant 0 : i32
    %c0_i32_1 = arith.constant 0 : i32
    return %arg0, %c0_i32, %c0_i32_0 : i32, i32, i32
  }
  func.func @transform_1(%arg0: i32) -> (i32, i32) {
    %c0_i32 = arith.constant 0 : i32
    %c0_i32_0 = arith.constant 0 : i32
    %c0_i32_1 = arith.constant 0 : i32
    return %c0_i32, %c0_i32_0 : i32, i32
  }
  func.func @transform_2(%arg0: i32) -> (i32, i32) {
    %c0_i32 = arith.constant 0 : i32
    %c0_i32_0 = arith.constant 0 : i32
    %c0_i32_1 = arith.constant 0 : i32
    return %c0_i32, %c0_i32_0 : i32, i32
  }
  func.func @transform_3(%arg0: i32) -> (i32, i32) {
    %c0_i32 = arith.constant 0 : i32
    %c0_i32_0 = arith.constant 0 : i32
    %c0_i32_1 = arith.constant 0 : i32
    return %c0_i32, %c0_i32_0 : i32, i32
  }
  func.func @transform_4(%arg0: i32) -> (i32, i32) {
    %c0_i32 = arith.constant 0 : i32
    %c0_i32_0 = arith.constant 0 : i32
    %c0_i32_1 = arith.constant 0 : i32
    return %c0_i32, %c0_i32_0 : i32, i32
  }
  func.func @transform_5(%arg0: i32) -> (i32, i32) {
    %c0_i32 = arith.constant 0 : i32
    %c0_i32_0 = arith.constant 0 : i32
    %c0_i32_1 = arith.constant 0 : i32
    return %c0_i32, %c0_i32_0 : i32, i32
  }
  func.func @transform_6(%arg0: i32) -> (i32, i32) {
    %c0_i32 = arith.constant 0 : i32
    %c0_i32_0 = arith.constant 0 : i32
    %c0_i32_1 = arith.constant 0 : i32
    return %c0_i32, %c0_i32_0 : i32, i32
  }
  func.func @transform_7(%arg0: i32) -> (i32, i32, i32) {
    %c0_i32 = arith.constant 0 : i32
    %c0_i32_0 = arith.constant 0 : i32
    %c0_i32_1 = arith.constant 0 : i32
    return %arg0, %c0_i32, %c0_i32_0 : i32, i32, i32
  }
}

</mosaic_0001>

<llo_original>
// kernel: tpu_custom_call.1
$region0: #{tpu_custom_call.1}
  #allocation0 [shape = 'u32[]', space=smem, size = 0x4, offset = 0x4, fixed_abs, tag = 'smem constant byte address 0x4 - core index']
  #allocation1 [shape = 'u32[144,128]{1,0:T(1,128)}', space=vmem, size = 0x12000, scoped, tag = 'internal scratch']
  %s0 = inlined_call_operand.vmem [shape: f32[2,4,256], index: 0, kind: input, shape index: {}]
  %s1 = inlined_call_operand.vmem [shape: f32[8,4], index: 1, kind: input, shape index: {}]
  %s2 = inlined_call_operand.vmem [shape: f32[8,1], index: 2, kind: input, shape index: {}]
  %s3 = inlined_call_operand.vmem [shape: f32[4,8], index: 3, kind: input, shape index: {}]
  %s4 = inlined_call_operand.vmem [shape: f32[4,1], index: 4, kind: input, shape index: {}]
  %s5 = inlined_call_operand.vmem [shape: f32[4,8], index: 5, kind: input, shape index: {}]
  %s6 = inlined_call_operand.vmem [shape: f32[4,1], index: 6, kind: input, shape index: {}]
  %s7 = inlined_call_operand.hbm [shape: f32[2,4,256], index: 7, kind: output, shape index: {}]
  %s8 = sld [smem:[#allocation0]]
  $region61: #{tpu_custom_call.1} parent=0
    _
  %s10 = ssub.s32 1, %s8
  %s11 = scalar_select 0, %s10, %s8
  $region1: #{tpu_custom_call.1} parent=0
    #allocation2 [shape = 'u8[8192]{0}', space=vmem, size = 0x2000, scoped, tag = 'output window, operand 0']
    #allocation3 [shape = 's32[2]{0}', space=sflag, size = 0x8, scoped, tag = 'scoped memory for tpu_custom_call.1']
    %12 = vsyncpa [#allocation3], 0
    %s13 = scalar_lea.sflag [#allocation3], 1
    %14 = vsyncpa %s13, 0
    loop: start=0, step=1, limit=4
    $region2: #{tpu_custom_call.1} parent=1 // loop_pre_header
      _
    $region3: #{tpu_custom_call.1} parent=1 // loop_header
      %s16 = sphi 0, %s20
      %p17 = scmp.ge.s32.totalorder %s16, 4
      %s26 = sphi 0, %s28
      %s29 = sphi 0, %s26
      %s30 = sphi 0, %s29
      %s46 = sphi 0, %s30
      %s50 = sphi 0, %s50
      %s52 = sphi 0, %s50
      %s53 = sphi 0, %s52
      %s67 = sphi 0, %s53
      %s71 = sphi 0, %s71
      %s73 = sphi 0, %s71
      %s74 = sphi 0, %s73
      %s88 = sphi 0, %s74
      %s92 = sphi 0, %s92
      %s94 = sphi 0, %s92
      %s95 = sphi 0, %s94
      %s109 = sphi 0, %s95
      %s113 = sphi 0, %s113
      %s115 = sphi 0, %s113
      %s116 = sphi 0, %s115
      %s130 = sphi 0, %s116
      %s134 = sphi 0, %s134
      %s136 = sphi 0, %s134
      %s137 = sphi 0, %s136
      %s151 = sphi 0, %s137
      %s155 = sphi 0, %s155
      %s157 = sphi 0, %s155
      %s158 = sphi 0, %s157
      %s172 = sphi 0, %s158
      %s178 = sphi 0, %s180
      %s181 = sphi 0, %s178
      %s182 = sphi 0, %s181
      %s198 = sphi 0, %s182
    $region4: #{tpu_custom_call.1} parent=1 // loop_header_branch
      %19 = sbr.rel (%p17) target = $region8
    $region5: #{tpu_custom_call.1} parent=1 // loop_body
      %s21 = ssub.s32 %s16, 1
      %s22 = ssub.s32 %s16, 2
      %s23 = sadd.s32 %s16, 1
      %s24 = ssub.s32 %s16, %s23
      %p25 = scmp.eq.s32.totalorder %s24, 0
      %s27 = sadd.s32 %s26, 1
      %s28 = scalar_select %p25, %s26, %s27
      %p31 = pneg %p25
      %p32 = scmp.eq.s32.totalorder %s16, 1
      %p33 = por %p31, %p32
      %p34 = scmp.ne.s32.totalorder %s26, %s29
      %p35 = scmp.eq.s32.totalorder %s16, 0
      %p36 = por %p34, %p35
      %p37 = scmp.ne.s32.totalorder %s26, %s29
      %p38 = scmp.eq.s32.totalorder %s21, 1
      %p39 = por %p37, %p38
      %p40 = scmp.ne.s32.totalorder %s29, %s30
      %p41 = scmp.eq.s32.totalorder %s21, 0
      %p42 = por %p40, %p41
      %p43 = scmp.ne.s32.totalorder %s29, %s30
      %p44 = scmp.eq.s32.totalorder %s22, 1
      %p45 = por %p43, %p44
      %p47 = scmp.ne.s32.totalorder %s30, %s46
      %p48 = scmp.eq.s32.totalorder %s22, 0
      %p49 = por %p47, %p48
      %s51 = sadd.s32 %s50, 1
      %p54 = scmp.eq.s32.totalorder %s16, 1
      %p55 = scmp.ne.s32.totalorder %s50, %s52
      %p56 = scmp.eq.s32.totalorder %s16, 0
      %p57 = por %p55, %p56
      %p58 = scmp.ne.s32.totalorder %s50, %s52
      %p59 = scmp.eq.s32.totalorder %s21, 1
      %p60 = por %p58, %p59
      %p61 = scmp.ne.s32.totalorder %s52, %s53
      %p62 = scmp.eq.s32.totalorder %s21, 0
      %p63 = por %p61, %p62
      %p64 = scmp.ne.s32.totalorder %s52, %s53
      %p65 = scmp.eq.s32.totalorder %s22, 1
      %p66 = por %p64, %p65
      %p68 = scmp.ne.s32.totalorder %s53, %s67
      %p69 = scmp.eq.s32.totalorder %s22, 0
      %p70 = por %p68, %p69
      %s72 = sadd.s32 %s71, 1
      %p75 = scmp.eq.s32.totalorder %s16, 1
      %p76 = scmp.ne.s32.totalorder %s71, %s73
      %p77 = scmp.eq.s32.totalorder %s16, 0
      %p78 = por %p76, %p77
      %p79 = scmp.ne.s32.totalorder %s71, %s73
      %p80 = scmp.eq.s32.totalorder %s21, 1
      %p81 = por %p79, %p80
      %p82 = scmp.ne.s32.totalorder %s73, %s74
      %p83 = scmp.eq.s32.totalorder %s21, 0
      %p84 = por %p82, %p83
      %p85 = scmp.ne.s32.totalorder %s73, %s74
      %p86 = scmp.eq.s32.totalorder %s22, 1
      %p87 = por %p85, %p86
      %p89 = scmp.ne.s32.totalorder %s74, %s88
      %p90 = scmp.eq.s32.totalorder %s22, 0
      %p91 = por %p89, %p90
      %s93 = sadd.s32 %s92, 1
      %p96 = scmp.eq.s32.totalorder %s16, 1
      %p97 = scmp.ne.s32.totalorder %s92, %s94
      %p98 = scmp.eq.s32.totalorder %s16, 0
      %p99 = por %p97, %p98
      %p100 = scmp.ne.s32.totalorder %s92, %s94
      %p101 = scmp.eq.s32.totalorder %s21, 1
      %p102 = por %p100, %p101
      %p103 = scmp.ne.s32.totalorder %s94, %s95
      %p104 = scmp.eq.s32.totalorder %s21, 0
      %p105 = por %p103, %p104
      %p106 = scmp.ne.s32.totalorder %s94, %s95
      %p107 = scmp.eq.s32.totalorder %s22, 1
      %p108 = por %p106, %p107
      %p110 = scmp.ne.s32.totalorder %s95, %s109
      %p111 = scmp.eq.s32.totalorder %s22, 0
      %p112 = por %p110, %p111
      %s114 = sadd.s32 %s113, 1
      %p117 = scmp.eq.s32.totalorder %s16, 1
      %p118 = scmp.ne.s32.totalorder %s113, %s115
      %p119 = scmp.eq.s32.totalorder %s16, 0
      %p120 = por %p118, %p119
      %p121 = scmp.ne.s32.totalorder %s113, %s115
      %p122 = scmp.eq.s32.totalorder %s21, 1
      %p123 = por %p121, %p122
      %p124 = scmp.ne.s32.totalorder %s115, %s116
      %p125 = scmp.eq.s32.totalorder %s21, 0
      %p126 = por %p124, %p125
      %p127 = scmp.ne.s32.totalorder %s115, %s116
      %p128 = scmp.eq.s32.totalorder %s22, 1
      %p129 = por %p127, %p128
      %p131 = scmp.ne.s32.totalorder %s116, %s130
      %p132 = scmp.eq.s32.totalorder %s22, 0
      %p133 = por %p131, %p132
      %s135 = sadd.s32 %s134, 1
      %p138 = scmp.eq.s32.totalorder %s16, 1
      %p139 = scmp.ne.s32.totalorder %s134, %s136
      %p140 = scmp.eq.s32.totalorder %s16, 0
      %p141 = por %p139, %p140
      %p142 = scmp.ne.s32.totalorder %s134, %s136
      %p143 = scmp.eq.s32.totalorder %s21, 1
      %p144 = por %p142, %p143
      %p145 = scmp.ne.s32.totalorder %s136, %s137
      %p146 = scmp.eq.s32.totalorder %s21, 0
      %p147 = por %p145, %p146
      %p148 = scmp.ne.s32.totalorder %s136, %s137
      %p149 = scmp.eq.s32.totalorder %s22, 1
      %p150 = por %p148, %p149
      %p152 = scmp.ne.s32.totalorder %s137, %s151
      %p153 = scmp.eq.s32.totalorder %s22, 0
      %p154 = por %p152, %p153
      %s156 = sadd.s32 %s155, 1
      %p159 = scmp.eq.s32.totalorder %s16, 1
      %p160 = scmp.ne.s32.totalorder %s155, %s157
      %p161 = scmp.eq.s32.totalorder %s16, 0
      %p162 = por %p160, %p161
      %p163 = scmp.ne.s32.totalorder %s155, %s157
      %p164 = scmp.eq.s32.totalorder %s21, 1
      %p165 = por %p163, %p164
      %p166 = scmp.ne.s32.totalorder %s157, %s158
      %p167 = scmp.eq.s32.totalorder %s21, 0
      %p168 = por %p166, %p167
      %p169 = scmp.ne.s32.totalorder %s157, %s158
      %p170 = scmp.eq.s32.totalorder %s22, 1
      %p171 = por %p169, %p170
      %p173 = scmp.ne.s32.totalorder %s158, %s172
      %p174 = scmp.eq.s32.totalorder %s22, 0
      %p175 = por %p173, %p174
      %s176 = ssub.s32 %s16, %s23
      %p177 = scmp.eq.s32.totalorder %s176, 0
      %s179 = sadd.s32 %s178, 1
      %s180 = scalar_select %p177, %s178, %s179
      %p183 = pneg %p177
      %p184 = scmp.eq.s32.totalorder %s16, 1
      %p185 = por %p183, %p184
      %p186 = scmp.ne.s32.totalorder %s178, %s181
      %p187 = scmp.eq.s32.totalorder %s16, 0
      %p188 = por %p186, %p187
      %p189 = scmp.ne.s32.totalorder %s178, %s181
      %p190 = scmp.eq.s32.totalorder %s21, 1
      %p191 = por %p189, %p190
      %p192 = scmp.ne.s32.totalorder %s181, %s182
      %p193 = scmp.eq.s32.totalorder %s21, 0
      %p194 = por %p192, %p193
      %p195 = scmp.ne.s32.totalorder %s181, %s182
      %p196 = scmp.eq.s32.totalorder %s22, 1
      %p197 = por %p195, %p196
      %p199 = scmp.ne.s32.totalorder %s182, %s198
      %p200 = scmp.eq.s32.totalorder %s22, 0
      %p201 = por %p199, %p200
      %p202 = scmp.le.s32.totalorder 1, %s16
      %p203 = scmp.lt.s32.totalorder %s16, 3
      %p204 = pnand %p202, %p203
      %p205 = pneg %p204
      // Predicated region
      $region9: #{tpu_custom_call.1} parent=5 // pred_check
        _
      $region10: #{tpu_custom_call.1} parent=5 // pred_check_branch
        %207 = sbr.rel (%p204) target = $region12
      $region11: #{tpu_custom_call.1} parent=5 // pred_region
        %s208 = ssub.s32 %s16, 1
        // Predicated region
        $region13: #{tpu_custom_call.1} parent=11 // pred_check
          %p209 = pneg %p63
        $region14: #{tpu_custom_call.1} parent=11 // pred_check_branch
          %211 = sbr.rel (%p209) target = $region16
        $region15: #{tpu_custom_call.1} parent=11 // pred_region
          _
        $region16: #{tpu_custom_call.1} parent=11 // pred_fallthru
          _
        // Predicated region
        $region17: #{tpu_custom_call.1} parent=11 // pred_check
          %p212 = pneg %p84
        $region18: #{tpu_custom_call.1} parent=11 // pred_check_branch
          %214 = sbr.rel (%p212) target = $region20
        $region19: #{tpu_custom_call.1} parent=11 // pred_region
          _
        $region20: #{tpu_custom_call.1} parent=11 // pred_fallthru
          _
        // Predicated region
        $region21: #{tpu_custom_call.1} parent=11 // pred_check
          %p215 = pneg %p105
        $region22: #{tpu_custom_call.1} parent=11 // pred_check_branch
          %217 = sbr.rel (%p215) target = $region24
        $region23: #{tpu_custom_call.1} parent=11 // pred_region
          _
        $region24: #{tpu_custom_call.1} parent=11 // pred_fallthru
          _
        // Predicated region
        $region25: #{tpu_custom_call.1} parent=11 // pred_check
          %p218 = pneg %p126
        $region26: #{tpu_custom_call.1} parent=11 // pred_check_branch
          %220 = sbr.rel (%p218) target = $region28
        $region27: #{tpu_custom_call.1} parent=11 // pred_region
          _
        $region28: #{tpu_custom_call.1} parent=11 // pred_fallthru
          _
        // Predicated region
        $region29: #{tpu_custom_call.1} parent=11 // pred_check
          %p221 = pneg %p147
        $region30: #{tpu_custom_call.1} parent=11 // pred_check_branch
          %223 = sbr.rel (%p221) target = $region32
        $region31: #{tpu_custom_call.1} parent=11 // pred_region
          _
        $region32: #{tpu_custom_call.1} parent=11 // pred_fallthru
          _
        // Predicated region
        $region33: #{tpu_custom_call.1} parent=11 // pred_check
          %p224 = pneg %p168
        $region34: #{tpu_custom_call.1} parent=11 // pred_check_branch
          %226 = sbr.rel (%p224) target = $region36
        $region35: #{tpu_custom_call.1} parent=11 // pred_region
          _
        $region36: #{tpu_custom_call.1} parent=11 // pred_fallthru
          _
      $region12: #{tpu_custom_call.1} parent=5 // pred_fallthru
        _
      %p227 = scmp.lt.s32.totalorder %s16, 2
      // Predicated region
      $region37: #{tpu_custom_call.1} parent=5 // pred_check
        %p228 = pneg %p227
      $region38: #{tpu_custom_call.1} parent=5 // pred_check_branch
        %230 = sbr.rel (%p228) target = $region40
      $region39: #{tpu_custom_call.1} parent=5 // pred_region
        // Predicated region
        $region41: #{tpu_custom_call.1} parent=39 // pred_check
          %p231 = pneg %p36
        $region42: #{tpu_custom_call.1} parent=39 // pred_check_branch
          %233 = sbr.rel (%p231) target = $region44
        $region43: #{tpu_custom_call.1} parent=39 // pred_region
          %p234 = scmp.lt.s32.totalorder %s16, 1
          %s235 = scalar_select %p234, %s16, 1
          %s236 = smul.addr %s235, 2
          %s237 = smul.addr %s236, 4
          %s238 = scalar_lea.vmem %s0, %s237
        $region44: #{tpu_custom_call.1} parent=39 // pred_fallthru
          _
      $region40: #{tpu_custom_call.1} parent=5 // pred_fallthru
        _
      %p239 = scmp.le.s32.totalorder 1, %s16
      %p240 = scmp.lt.s32.totalorder %s16, 3
      %p241 = pnand %p239, %p240
      %p242 = pneg %p241
      // Predicated region
      $region45: #{tpu_custom_call.1} parent=5 // pred_check
        _
      $region46: #{tpu_custom_call.1} parent=5 // pred_check_branch
        %244 = sbr.rel (%p241) target = $region48
      $region47: #{tpu_custom_call.1} parent=5 // pred_region
        %s245 = ssub.s32 %s16, 1
        %p246 = scmp.lt.s32.totalorder %s21, 1
        %s247 = scalar_select %p246, %s21, 1
        %s248 = smul.addr %s247, 2
        %s249 = smul.addr %s248, 4
        %s250 = scalar_lea.vmem %s0, %s249
        %p251 = pneg %p42
        %p252 = pneg %p39
        %p253 = pneg %p63
        %p254 = pneg %p60
        %p255 = pneg %p84
        %p256 = pneg %p81
        %p257 = pneg %p105
        %p258 = pneg %p102
        %p259 = pneg %p126
        %p260 = pneg %p123
        %p261 = pneg %p147
        %p262 = pneg %p144
        %p263 = pneg %p168
        %p264 = pneg %p165
        %p265 = pneg %p194
        %p266 = pneg %p191
        %s267 = sand.u32 %s181, 1
        %s268 = scalar_lea.sflag [#allocation3], %s267
        %s269 = sand.u32 %s181, 1
        %s270 = smul.addr %s269, 8
        %s271 = scalar_lea.vmem [#allocation2], %s270
        %p272 = scmp.lt.s32.totalorder %s21, 1
        %s273 = scalar_select %p272, %s21, 1
        %s274 = smul.addr %s273, 2
        %s275 = smul.addr %s274, 4
        %s276 = scalar_lea.vmem %s0, %s275
        %v277 = vld [vmem:[%s276] sm:$0xff]
        %v278 = vlaneseq
        %v279 = vshrl.u32 %v278, 7
        %v280 = vadd.s32 %v279, 8
        %v281 = vadd.s32 %v279, 16
        %v282 = vadd.s32 %v279, 24
        %v283 = vadd.s32 %v279, 32
        %v284 = vadd.s32 %v279, 40
        %v285 = vadd.s32 %v279, 48
        %v286 = vadd.s32 %v279, 56
        %v287 = vadd.s32 %v279, 64
        %v288 = vadd.s32 %v279, 72
        %v289 = vadd.s32 %v279, 80
        %v290 = vadd.s32 %v279, 88
        %v291 = vadd.s32 %v279, 96
        %v292 = vadd.s32 %v279, 104
        %v293 = vadd.s32 %v279, 112
        %v294 = vadd.s32 %v279, 120
        %v295 = vadd.s32 %v279, 128
        %v296 = vadd.s32 %v279, 136
        %v297 = vadd.s32 %v279, 144
        %v298 = vadd.s32 %v279, 152
        %v299 = vadd.s32 %v279, 160
        %v300 = vadd.s32 %v279, 168
        %v301 = vadd.s32 %v279, 176
        %v302 = vadd.s32 %v279, 184
        %v303 = vadd.s32 %v279, 192
        %v304 = vadd.s32 %v279, 200
        %v305 = vadd.s32 %v279, 208
        %v306 = vadd.s32 %v279, 216
        %v307 = vadd.s32 %v279, 224
        %v308 = vadd.s32 %v279, 232
        %v309 = vadd.s32 %v279, 240
        %v310 = vadd.s32 %v279, 248
        %v311 = vlaneseq
        %v312 = vand.u32 %v311, 127
        %v313 = vmul.u32 %v312, 16
        %vm314 = vcmp.ge.s32.totalorder %v279, %v313
        %vm315 = vcmp.ge.s32.totalorder %v280, %v313
        %vm316 = vcmp.ge.s32.totalorder %v281, %v313
        %vm317 = vcmp.ge.s32.totalorder %v282, %v313
        %vm318 = vcmp.ge.s32.totalorder %v283, %v313
        %vm319 = vcmp.ge.s32.totalorder %v284, %v313
        %vm320 = vcmp.ge.s32.totalorder %v285, %v313
        %vm321 = vcmp.ge.s32.totalorder %v286, %v313
        %vm322 = vcmp.ge.s32.totalorder %v287, %v313
        %vm323 = vcmp.ge.s32.totalorder %v288, %v313
        %vm324 = vcmp.ge.s32.totalorder %v289, %v313
        %vm325 = vcmp.ge.s32.totalorder %v290, %v313
        %vm326 = vcmp.ge.s32.totalorder %v291, %v313
        %vm327 = vcmp.ge.s32.totalorder %v292, %v313
        %vm328 = vcmp.ge.s32.totalorder %v293, %v313
        %vm329 = vcmp.ge.s32.totalorder %v294, %v313
        %vm330 = vcmp.ge.s32.totalorder %v295, %v313
        %vm331 = vcmp.ge.s32.totalorder %v296, %v313
        %vm332 = vcmp.ge.s32.totalorder %v297, %v313
        %vm333 = vcmp.ge.s32.totalorder %v298, %v313
        %vm334 = vcmp.ge.s32.totalorder %v299, %v313
        %vm335 = vcmp.ge.s32.totalorder %v300, %v313
        %vm336 = vcmp.ge.s32.totalorder %v301, %v313
        %vm337 = vcmp.ge.s32.totalorder %v302, %v313
        %vm338 = vcmp.ge.s32.totalorder %v303, %v313
        %vm339 = vcmp.ge.s32.totalorder %v304, %v313
        %vm340 = vcmp.ge.s32.totalorder %v305, %v313
        %vm341 = vcmp.ge.s32.totalorder %v306, %v313
        %vm342 = vcmp.ge.s32.totalorder %v307, %v313
        %vm343 = vcmp.ge.s32.totalorder %v308, %v313
        %vm344 = vcmp.ge.s32.totalorder %v309, %v313
        %vm345 = vcmp.ge.s32.totalorder %v310, %v313
        %v346 = vsel %vm314, 1, 0
        %v347 = vsel %vm315, 1, 0
        %v348 = vsel %vm316, 1, 0
        %v349 = vsel %vm317, 1, 0
        %v350 = vsel %vm318, 1, 0
        %v351 = vsel %vm319, 1, 0
        %v352 = vsel %vm320, 1, 0
        %v353 = vsel %vm321, 1, 0
        %v354 = vsel %vm322, 1, 0
        %v355 = vsel %vm323, 1, 0
        %v356 = vsel %vm324, 1, 0
        %v357 = vsel %vm325, 1, 0
        %v358 = vsel %vm326, 1, 0
        %v359 = vsel %vm327, 1, 0
        %v360 = vsel %vm328, 1, 0
        %v361 = vsel %vm329, 1, 0
        %v362 = vsel %vm330, 1, 0
        %v363 = vsel %vm331, 1, 0
        %v364 = vsel %vm332, 1, 0
        %v365 = vsel %vm333, 1, 0
        %v366 = vsel %vm334, 1, 0
        %v367 = vsel %vm335, 1, 0
        %v368 = vsel %vm336, 1, 0
        %v369 = vsel %vm337, 1, 0
        %v370 = vsel %vm338, 1, 0
        %v371 = vsel %vm339, 1, 0
        %v372 = vsel %vm340, 1, 0
        %v373 = vsel %vm341, 1, 0
        %v374 = vsel %vm342, 1, 0
        %v375 = vsel %vm343, 1, 0
        %v376 = vsel %vm344, 1, 0
        %v377 = vsel %vm345, 1, 0
        %v378 = vcvt.s32.f32 %v346
        %v379 = vcvt.s32.f32 %v347
        %v380 = vcvt.s32.f32 %v348
        %v381 = vcvt.s32.f32 %v349
        %v382 = vcvt.s32.f32 %v350
        %v383 = vcvt.s32.f32 %v351
        %v384 = vcvt.s32.f32 %v352
        %v385 = vcvt.s32.f32 %v353
        %v386 = vcvt.s32.f32 %v354
        %v387 = vcvt.s32.f32 %v355
        %v388 = vcvt.s32.f32 %v356
        %v389 = vcvt.s32.f32 %v357
        %v390 = vcvt.s32.f32 %v358
        %v391 = vcvt.s32.f32 %v359
        %v392 = vcvt.s32.f32 %v360
        %v393 = vcvt.s32.f32 %v361
        %v394 = vcvt.s32.f32 %v362
        %v395 = vcvt.s32.f32 %v363
        %v396 = vcvt.s32.f32 %v364
        %v397 = vcvt.s32.f32 %v365
        %v398 = vcvt.s32.f32 %v366
        %v399 = vcvt.s32.f32 %v367
        %v400 = vcvt.s32.f32 %v368
        %v401 = vcvt.s32.f32 %v369
        %v402 = vcvt.s32.f32 %v370
        %v403 = vcvt.s32.f32 %v371
        %v404 = vcvt.s32.f32 %v372
        %v405 = vcvt.s32.f32 %v373
        %v406 = vcvt.s32.f32 %v374
        %v407 = vcvt.s32.f32 %v375
        %v408 = vcvt.s32.f32 %v376
        %v409 = vcvt.s32.f32 %v377
        %v410 = vadd.s32 %v313, 16
        %vm411 = vcmp.lt.s32.totalorder %v279, %v410
        %vm412 = vcmp.lt.s32.totalorder %v280, %v410
        %vm413 = vcmp.lt.s32.totalorder %v281, %v410
        %vm414 = vcmp.lt.s32.totalorder %v282, %v410
        %vm415 = vcmp.lt.s32.totalorder %v283, %v410
        %vm416 = vcmp.lt.s32.totalorder %v284, %v410
        %vm417 = vcmp.lt.s32.totalorder %v285, %v410
        %vm418 = vcmp.lt.s32.totalorder %v286, %v410
        %vm419 = vcmp.lt.s32.totalorder %v287, %v410
        %vm420 = vcmp.lt.s32.totalorder %v288, %v410
        %vm421 = vcmp.lt.s32.totalorder %v289, %v410
        %vm422 = vcmp.lt.s32.totalorder %v290, %v410
        %vm423 = vcmp.lt.s32.totalorder %v291, %v410
        %vm424 = vcmp.lt.s32.totalorder %v292, %v410
        %vm425 = vcmp.lt.s32.totalorder %v293, %v410
        %vm426 = vcmp.lt.s32.totalorder %v294, %v410
        %vm427 = vcmp.lt.s32.totalorder %v295, %v410
        %vm428 = vcmp.lt.s32.totalorder %v296, %v410
        %vm429 = vcmp.lt.s32.totalorder %v297, %v410
        %vm430 = vcmp.lt.s32.totalorder %v298, %v410
        %vm431 = vcmp.lt.s32.totalorder %v299, %v410
        %vm432 = vcmp.lt.s32.totalorder %v300, %v410
        %vm433 = vcmp.lt.s32.totalorder %v301, %v410
        %vm434 = vcmp.lt.s32.totalorder %v302, %v410
        %vm435 = vcmp.lt.s32.totalorder %v303, %v410
        %vm436 = vcmp.lt.s32.totalorder %v304, %v410
        %vm437 = vcmp.lt.s32.totalorder %v305, %v410
        %vm438 = vcmp.lt.s32.totalorder %v306, %v410
        %vm439 = vcmp.lt.s32.totalorder %v307, %v410
        %vm440 = vcmp.lt.s32.totalorder %v308, %v410
        %vm441 = vcmp.lt.s32.totalorder %v309, %v410
        %vm442 = vcmp.lt.s32.totalorder %v310, %v410
        %v443 = vsel %vm411, 1, 0
        %v444 = vsel %vm412, 1, 0
        %v445 = vsel %vm413, 1, 0
        %v446 = vsel %vm414, 1, 0
        %v447 = vsel %vm415, 1, 0
        %v448 = vsel %vm416, 1, 0
        %v449 = vsel %vm417, 1, 0
        %v450 = vsel %vm418, 1, 0
        %v451 = vsel %vm419, 1, 0
        %v452 = vsel %vm420, 1, 0
        %v453 = vsel %vm421, 1, 0
        %v454 = vsel %vm422, 1, 0
        %v455 = vsel %vm423, 1, 0
        %v456 = vsel %vm424, 1, 0
        %v457 = vsel %vm425, 1, 0
        %v458 = vsel %vm426, 1, 0
        %v459 = vsel %vm427, 1, 0
        %v460 = vsel %vm428, 1, 0
        %v461 = vsel %vm429, 1, 0
        %v462 = vsel %vm430, 1, 0
        %v463 = vsel %vm431, 1, 0
        %v464 = vsel %vm432, 1, 0
        %v465 = vsel %vm433, 1, 0
        %v466 = vsel %vm434, 1, 0
        %v467 = vsel %vm435, 1, 0
        %v468 = vsel %vm436, 1, 0
        %v469 = vsel %vm437, 1, 0
        %v470 = vsel %vm438, 1, 0
        %v471 = vsel %vm439, 1, 0
        %v472 = vsel %vm440, 1, 0
        %v473 = vsel %vm441, 1, 0
        %v474 = vsel %vm442, 1, 0
        %v475 = vcvt.s32.f32 %v443
        %v476 = vcvt.s32.f32 %v444
        %v477 = vcvt.s32.f32 %v445
        %v478 = vcvt.s32.f32 %v446
        %v479 = vcvt.s32.f32 %v447
        %v480 = vcvt.s32.f32 %v448
        %v481 = vcvt.s32.f32 %v449
        %v482 = vcvt.s32.f32 %v450
        %v483 = vcvt.s32.f32 %v451
        %v484 = vcvt.s32.f32 %v452
        %v485 = vcvt.s32.f32 %v453
        %v486 = vcvt.s32.f32 %v454
        %v487 = vcvt.s32.f32 %v455
        %v488 = vcvt.s32.f32 %v456
        %v489 = vcvt.s32.f32 %v457
        %v490 = vcvt.s32.f32 %v458
        %v491 = vcvt.s32.f32 %v459
        %v492 = vcvt.s32.f32 %v460
        %v493 = vcvt.s32.f32 %v461
        %v494 = vcvt.s32.f32 %v462
        %v495 = vcvt.s32.f32 %v463
        %v496 = vcvt.s32.f32 %v464
        %v497 = vcvt.s32.f32 %v465
        %v498 = vcvt.s32.f32 %v466
        %v499 = vcvt.s32.f32 %v467
        %v500 = vcvt.s32.f32 %v468
        %v501 = vcvt.s32.f32 %v469
        %v502 = vcvt.s32.f32 %v470
        %v503 = vcvt.s32.f32 %v471
        %v504 = vcvt.s32.f32 %v472
        %v505 = vcvt.s32.f32 %v473
        %v506 = vcvt.s32.f32 %v474
        %v507 = vmul.f32 %v378, %v475
        %v508 = vmul.f32 %v379, %v476
        %v509 = vmul.f32 %v380, %v477
        %v510 = vmul.f32 %v381, %v478
        %v511 = vmul.f32 %v382, %v479
        %v512 = vmul.f32 %v383, %v480
        %v513 = vmul.f32 %v384, %v481
        %v514 = vmul.f32 %v385, %v482
        %v515 = vmul.f32 %v386, %v483
        %v516 = vmul.f32 %v387, %v484
        %v517 = vmul.f32 %v388, %v485
        %v518 = vmul.f32 %v389, %v486
        %v519 = vmul.f32 %v390, %v487
        %v520 = vmul.f32 %v391, %v488
        %v521 = vmul.f32 %v392, %v489
        %v522 = vmul.f32 %v393, %v490
        %v523 = vmul.f32 %v394, %v491
        %v524 = vmul.f32 %v395, %v492
        %v525 = vmul.f32 %v396, %v493
        %v526 = vmul.f32 %v397, %v494
        %v527 = vmul.f32 %v398, %v495
        %v528 = vmul.f32 %v399, %v496
        %v529 = vmul.f32 %v400, %v497
        %v530 = vmul.f32 %v401, %v498
        %v531 = vmul.f32 %v402, %v499
        %v532 = vmul.f32 %v403, %v500
        %v533 = vmul.f32 %v404, %v501
        %v534 = vmul.f32 %v405, %v502
        %v535 = vmul.f32 %v406, %v503
        %v536 = vmul.f32 %v407, %v504
        %v537 = vmul.f32 %v408, %v505
        %v538 = vmul.f32 %v409, %v506
        %vm539 = vcmask 130048
        %v540 = vsel %vm539, %v378, 0.0
        %541 = vadd.xlane.f32.xlu0 %v540
        %v542 = vpop.xlane.xlu0 %541
        %v543 = vsel %vm539, %v379, 0.0
        %544 = vadd.xlane.f32.xlu0 %v543
        %v545 = vpop.xlane.xlu0 %544
        %v546 = vsel %vm539, %v380, 0.0
        %547 = vadd.xlane.f32.xlu0 %v546
        %v548 = vpop.xlane.xlu0 %547
        %v549 = vsel %vm539, %v381, 0.0
        %550 = vadd.xlane.f32.xlu0 %v549
        %v551 = vpop.xlane.xlu0 %550
        %v552 = vsel %vm539, %v382, 0.0
        %553 = vadd.xlane.f32.xlu0 %v552
        %v554 = vpop.xlane.xlu0 %553
        %v555 = vsel %vm539, %v383, 0.0
        %556 = vadd.xlane.f32.xlu0 %v555
        %v557 = vpop.xlane.xlu0 %556
        %v558 = vsel %vm539, %v384, 0.0
        %559 = vadd.xlane.f32.xlu0 %v558
        %v560 = vpop.xlane.xlu0 %559
        %v561 = vsel %vm539, %v385, 0.0
        %562 = vadd.xlane.f32.xlu0 %v561
        %v563 = vpop.xlane.xlu0 %562
        %v564 = vsel %vm539, %v386, 0.0
        %565 = vadd.xlane.f32.xlu0 %v564
        %v566 = vpop.xlane.xlu0 %565
        %v567 = vsel %vm539, %v387, 0.0
        %568 = vadd.xlane.f32.xlu0 %v567
        %v569 = vpop.xlane.xlu0 %568
        %v570 = vsel %vm539, %v388, 0.0
        %571 = vadd.xlane.f32.xlu0 %v570
        %v572 = vpop.xlane.xlu0 %571
        %v573 = vsel %vm539, %v389, 0.0
        %574 = vadd.xlane.f32.xlu0 %v573
        %v575 = vpop.xlane.xlu0 %574
        %v576 = vsel %vm539, %v390, 0.0
        %577 = vadd.xlane.f32.xlu0 %v576
        %v578 = vpop.xlane.xlu0 %577
        %v579 = vsel %vm539, %v391, 0.0
        %580 = vadd.xlane.f32.xlu0 %v579
        %v581 = vpop.xlane.xlu0 %580
        %v582 = vsel %vm539, %v392, 0.0
        %583 = vadd.xlane.f32.xlu0 %v582
        %v584 = vpop.xlane.xlu0 %583
        %v585 = vsel %vm539, %v393, 0.0
        %586 = vadd.xlane.f32.xlu0 %v585
        %v587 = vpop.xlane.xlu0 %586
        %v588 = vsel %vm539, %v394, 0.0
        %589 = vadd.xlane.f32.xlu0 %v588
        %v590 = vpop.xlane.xlu0 %589
        %v591 = vsel %vm539, %v395, 0.0
        %592 = vadd.xlane.f32.xlu0 %v591
        %v593 = vpop.xlane.xlu0 %592
        %v594 = vsel %vm539, %v396, 0.0
        %595 = vadd.xlane.f32.xlu0 %v594
        %v596 = vpop.xlane.xlu0 %595
        %v597 = vsel %vm539, %v397, 0.0
        %598 = vadd.xlane.f32.xlu0 %v597
        %v599 = vpop.xlane.xlu0 %598
        %v600 = vsel %vm539, %v398, 0.0
        %601 = vadd.xlane.f32.xlu0 %v600
        %v602 = vpop.xlane.xlu0 %601
        %v603 = vsel %vm539, %v399, 0.0
        %604 = vadd.xlane.f32.xlu0 %v603
        %v605 = vpop.xlane.xlu0 %604
        %v606 = vsel %vm539, %v400, 0.0
        %607 = vadd.xlane.f32.xlu0 %v606
        %v608 = vpop.xlane.xlu0 %607
        %v609 = vsel %vm539, %v401, 0.0
        %610 = vadd.xlane.f32.xlu0 %v609
        %v611 = vpop.xlane.xlu0 %610
        %v612 = vsel %vm539, %v402, 0.0
        %613 = vadd.xlane.f32.xlu0 %v612
        %v614 = vpop.xlane.xlu0 %613
        %v615 = vsel %vm539, %v403, 0.0
        %616 = vadd.xlane.f32.xlu0 %v615
        %v617 = vpop.xlane.xlu0 %616
        %v618 = vsel %vm539, %v404, 0.0
        %619 = vadd.xlane.f32.xlu0 %v618
        %v620 = vpop.xlane.xlu0 %619
        %v621 = vsel %vm539, %v405, 0.0
        %622 = vadd.xlane.f32.xlu0 %v621
        %v623 = vpop.xlane.xlu0 %622
        %v624 = vsel %vm539, %v406, 0.0
        %625 = vadd.xlane.f32.xlu0 %v624
        %v626 = vpop.xlane.xlu0 %625
        %v627 = vsel %vm539, %v407, 0.0
        %628 = vadd.xlane.f32.xlu0 %v627
        %v629 = vpop.xlane.xlu0 %628
        %v630 = vsel %vm539, %v408, 0.0
        %631 = vadd.xlane.f32.xlu0 %v630
        %v632 = vpop.xlane.xlu0 %631
        %v633 = vsel %vm539, %v409, 0.0
        %634 = vadd.xlane.f32.xlu0 %v633
        %v635 = vpop.xlane.xlu0 %634
        %v636 = vsub.f32 %v542, 1.0
        %v637 = vsub.f32 %v545, 1.0
        %v638 = vsub.f32 %v548, 1.0
        %v639 = vsub.f32 %v551, 1.0
        %v640 = vsub.f32 %v554, 1.0
        %v641 = vsub.f32 %v557, 1.0
        %v642 = vsub.f32 %v560, 1.0
        %v643 = vsub.f32 %v563, 1.0
        %v644 = vsub.f32 %v566, 1.0
        %v645 = vsub.f32 %v569, 1.0
        %v646 = vsub.f32 %v572, 1.0
        %v647 = vsub.f32 %v575, 1.0
        %v648 = vsub.f32 %v578, 1.0
        %v649 = vsub.f32 %v581, 1.0
        %v650 = vsub.f32 %v584, 1.0
        %v651 = vsub.f32 %v587, 1.0
        %v652 = vsub.f32 %v590, 1.0
        %v653 = vsub.f32 %v593, 1.0
        %v654 = vsub.f32 %v596, 1.0
        %v655 = vsub.f32 %v599, 1.0
        %v656 = vsub.f32 %v602, 1.0
        %v657 = vsub.f32 %v605, 1.0
        %v658 = vsub.f32 %v608, 1.0
        %v659 = vsub.f32 %v611, 1.0
        %v660 = vsub.f32 %v614, 1.0
        %v661 = vsub.f32 %v617, 1.0
        %v662 = vsub.f32 %v620, 1.0
        %v663 = vsub.f32 %v623, 1.0
        %v664 = vsub.f32 %v626, 1.0
        %v665 = vsub.f32 %v629, 1.0
        %v666 = vsub.f32 %v632, 1.0
        %v667 = vsub.f32 %v635, 1.0
        %v668 = vcvt.s32.f32 %v279
        %v669 = vcvt.s32.f32 %v280
        %v670 = vcvt.s32.f32 %v281
        %v671 = vcvt.s32.f32 %v282
        %v672 = vcvt.s32.f32 %v283
        %v673 = vcvt.s32.f32 %v284
        %v674 = vcvt.s32.f32 %v285
        %v675 = vcvt.s32.f32 %v286
        %v676 = vcvt.s32.f32 %v287
        %v677 = vcvt.s32.f32 %v288
        %v678 = vcvt.s32.f32 %v289
        %v679 = vcvt.s32.f32 %v290
        %v680 = vcvt.s32.f32 %v291
        %v681 = vcvt.s32.f32 %v292
        %v682 = vcvt.s32.f32 %v293
        %v683 = vcvt.s32.f32 %v294
        %v684 = vcvt.s32.f32 %v295
        %v685 = vcvt.s32.f32 %v296
        %v686 = vcvt.s32.f32 %v297
        %v687 = vcvt.s32.f32 %v298
        %v688 = vcvt.s32.f32 %v299
        %v689 = vcvt.s32.f32 %v300
        %v690 = vcvt.s32.f32 %v301
        %v691 = vcvt.s32.f32 %v302
        %v692 = vcvt.s32.f32 %v303
        %v693 = vcvt.s32.f32 %v304
        %v694 = vcvt.s32.f32 %v305
        %v695 = vcvt.s32.f32 %v306
        %v696 = vcvt.s32.f32 %v307
        %v697 = vcvt.s32.f32 %v308
        %v698 = vcvt.s32.f32 %v309
        %v699 = vcvt.s32.f32 %v310
        %v700 = vmul.f32 %v636, 16.0
        %v701 = vmul.f32 %v637, 16.0
        %v702 = vmul.f32 %v638, 16.0
        %v703 = vmul.f32 %v639, 16.0
        %v704 = vmul.f32 %v640, 16.0
        %v705 = vmul.f32 %v641, 16.0
        %v706 = vmul.f32 %v642, 16.0
        %v707 = vmul.f32 %v643, 16.0
        %v708 = vmul.f32 %v644, 16.0
        %v709 = vmul.f32 %v645, 16.0
        %v710 = vmul.f32 %v646, 16.0
        %v711 = vmul.f32 %v647, 16.0
        %v712 = vmul.f32 %v648, 16.0
        %v713 = vmul.f32 %v649, 16.0
        %v714 = vmul.f32 %v650, 16.0
        %v715 = vmul.f32 %v651, 16.0
        %v716 = vmul.f32 %v652, 16.0
        %v717 = vmul.f32 %v653, 16.0
        %v718 = vmul.f32 %v654, 16.0
        %v719 = vmul.f32 %v655, 16.0
        %v720 = vmul.f32 %v656, 16.0
        %v721 = vmul.f32 %v657, 16.0
        %v722 = vmul.f32 %v658, 16.0
        %v723 = vmul.f32 %v659, 16.0
        %v724 = vmul.f32 %v660, 16.0
        %v725 = vmul.f32 %v661, 16.0
        %v726 = vmul.f32 %v662, 16.0
        %v727 = vmul.f32 %v663, 16.0
        %v728 = vmul.f32 %v664, 16.0
        %v729 = vmul.f32 %v665, 16.0
        %v730 = vmul.f32 %v666, 16.0
        %v731 = vmul.f32 %v667, 16.0
        %v732 = vsub.f32 %v668, %v700
        %v733 = vsub.f32 %v669, %v701
        %v734 = vsub.f32 %v670, %v702
        %v735 = vsub.f32 %v671, %v703
        %v736 = vsub.f32 %v672, %v704
        %v737 = vsub.f32 %v673, %v705
        %v738 = vsub.f32 %v674, %v706
        %v739 = vsub.f32 %v675, %v707
        %v740 = vsub.f32 %v676, %v708
        %v741 = vsub.f32 %v677, %v709
        %v742 = vsub.f32 %v678, %v710
        %v743 = vsub.f32 %v679, %v711
        %v744 = vsub.f32 %v680, %v712
        %v745 = vsub.f32 %v681, %v713
        %v746 = vsub.f32 %v682, %v714
        %v747 = vsub.f32 %v683, %v715
        %v748 = vsub.f32 %v684, %v716
        %v749 = vsub.f32 %v685, %v717
        %v750 = vsub.f32 %v686, %v718
        %v751 = vsub.f32 %v687, %v719
        %v752 = vsub.f32 %v688, %v720
        %v753 = vsub.f32 %v689, %v721
        %v754 = vsub.f32 %v690, %v722
        %v755 = vsub.f32 %v691, %v723
        %v756 = vsub.f32 %v692, %v724
        %v757 = vsub.f32 %v693, %v725
        %v758 = vsub.f32 %v694, %v726
        %v759 = vsub.f32 %v695, %v727
        %v760 = vsub.f32 %v696, %v728
        %v761 = vsub.f32 %v697, %v729
        %v762 = vsub.f32 %v698, %v730
        %v763 = vsub.f32 %v699, %v731
        %v764 = vcvt.s32.f32 %v312
        %vm765 = vcmp.eq.f32.partialorder %v732, %v764
        %vm766 = vcmp.eq.f32.partialorder %v733, %v764
        %vm767 = vcmp.eq.f32.partialorder %v734, %v764
        %vm768 = vcmp.eq.f32.partialorder %v735, %v764
        %vm769 = vcmp.eq.f32.partialorder %v736, %v764
        %vm770 = vcmp.eq.f32.partialorder %v737, %v764
        %vm771 = vcmp.eq.f32.partialorder %v738, %v764
        %vm772 = vcmp.eq.f32.partialorder %v739, %v764
        %vm773 = vcmp.eq.f32.partialorder %v740, %v764
        %vm774 = vcmp.eq.f32.partialorder %v741, %v764
        %vm775 = vcmp.eq.f32.partialorder %v742, %v764
        %vm776 = vcmp.eq.f32.partialorder %v743, %v764
        %vm777 = vcmp.eq.f32.partialorder %v744, %v764
        %vm778 = vcmp.eq.f32.partialorder %v745, %v764
        %vm779 = vcmp.eq.f32.partialorder %v746, %v764
        %vm780 = vcmp.eq.f32.partialorder %v747, %v764
        %vm781 = vcmp.eq.f32.partialorder %v748, %v764
        %vm782 = vcmp.eq.f32.partialorder %v749, %v764
        %vm783 = vcmp.eq.f32.partialorder %v750, %v764
        %vm784 = vcmp.eq.f32.partialorder %v751, %v764
        %vm785 = vcmp.eq.f32.partialorder %v752, %v764
        %vm786 = vcmp.eq.f32.partialorder %v753, %v764
        %vm787 = vcmp.eq.f32.partialorder %v754, %v764
        %vm788 = vcmp.eq.f32.partialorder %v755, %v764
        %vm789 = vcmp.eq.f32.partialorder %v756, %v764
        %vm790 = vcmp.eq.f32.partialorder %v757, %v764
        %vm791 = vcmp.eq.f32.partialorder %v758, %v764
        %vm792 = vcmp.eq.f32.partialorder %v759, %v764
        %vm793 = vcmp.eq.f32.partialorder %v760, %v764
        %vm794 = vcmp.eq.f32.partialorder %v761, %v764
        %vm795 = vcmp.eq.f32.partialorder %v762, %v764
        %vm796 = vcmp.eq.f32.partialorder %v763, %v764
        %v797 = vsel %vm765, 1, 0
        %v798 = vsel %vm766, 1, 0
        %v799 = vsel %vm767, 1, 0
        %v800 = vsel %vm768, 1, 0
        %v801 = vsel %vm769, 1, 0
        %v802 = vsel %vm770, 1, 0
        %v803 = vsel %vm771, 1, 0
        %v804 = vsel %vm772, 1, 0
        %v805 = vsel %vm773, 1, 0
        %v806 = vsel %vm774, 1, 0
        %v807 = vsel %vm775, 1, 0
        %v808 = vsel %vm776, 1, 0
        %v809 = vsel %vm777, 1, 0
        %v810 = vsel %vm778, 1, 0
        %v811 = vsel %vm779, 1, 0
        %v812 = vsel %vm780, 1, 0
        %v813 = vsel %vm781, 1, 0
        %v814 = vsel %vm782, 1, 0
        %v815 = vsel %vm783, 1, 0
        %v816 = vsel %vm784, 1, 0
        %v817 = vsel %vm785, 1, 0
        %v818 = vsel %vm786, 1, 0
        %v819 = vsel %vm787, 1, 0
        %v820 = vsel %vm788, 1, 0
        %v821 = vsel %vm789, 1, 0
        %v822 = vsel %vm790, 1, 0
        %v823 = vsel %vm791, 1, 0
        %v824 = vsel %vm792, 1, 0
        %v825 = vsel %vm793, 1, 0
        %v826 = vsel %vm794, 1, 0
        %v827 = vsel %vm795, 1, 0
        %v828 = vsel %vm796, 1, 0
        %v829 = vcvt.s32.f32 %v797
        %v830 = vcvt.s32.f32 %v798
        %v831 = vcvt.s32.f32 %v799
        %v832 = vcvt.s32.f32 %v800
        %v833 = vcvt.s32.f32 %v801
        %v834 = vcvt.s32.f32 %v802
        %v835 = vcvt.s32.f32 %v803
        %v836 = vcvt.s32.f32 %v804
        %v837 = vcvt.s32.f32 %v805
        %v838 = vcvt.s32.f32 %v806
        %v839 = vcvt.s32.f32 %v807
        %v840 = vcvt.s32.f32 %v808
        %v841 = vcvt.s32.f32 %v809
        %v842 = vcvt.s32.f32 %v810
        %v843 = vcvt.s32.f32 %v811
        %v844 = vcvt.s32.f32 %v812
        %v845 = vcvt.s32.f32 %v813
        %v846 = vcvt.s32.f32 %v814
        %v847 = vcvt.s32.f32 %v815
        %v848 = vcvt.s32.f32 %v816
        %v849 = vcvt.s32.f32 %v817
        %v850 = vcvt.s32.f32 %v818
        %v851 = vcvt.s32.f32 %v819
        %v852 = vcvt.s32.f32 %v820
        %v853 = vcvt.s32.f32 %v821
        %v854 = vcvt.s32.f32 %v822
        %v855 = vcvt.s32.f32 %v823
        %v856 = vcvt.s32.f32 %v824
        %v857 = vcvt.s32.f32 %v825
        %v858 = vcvt.s32.f32 %v826
        %v859 = vcvt.s32.f32 %v827
        %v860 = vcvt.s32.f32 %v828
        %v862 = vcombine.high %v277, %v277
        %864 = vmatprep.subr.mxu0 0.0
        %865 = vmatpush1.msra.mxu0 %v507
        %866 = vmatprep.subr.mxu0 0.0
        %867 = vmatpush1.msra.mxu0 %v508
        %868 = vmatprep.subr.mxu0 0.0
        %869 = vmatpush1.msra.mxu0 %v509
        %870 = vmatprep.subr.mxu0 0.0
        %871 = vmatpush1.msra.mxu0 %v510
        %872 = vmatprep.subr.mxu0 0.0
        %873 = vmatpush1.msra.mxu0 %v511
        %874 = vmatprep.subr.mxu0 0.0
        %875 = vmatpush1.msra.mxu0 %v512
        %876 = vmatprep.subr.mxu0 0.0
        %877 = vmatpush1.msra.mxu0 %v513
        %878 = vmatprep.subr.mxu0 0.0
        %879 = vmatpush1.msra.mxu0 %v514
        %880 = vmatprep.subr.mxu0 0.0
        %881 = vmatpush1.msra.mxu0 %v515
        %882 = vmatprep.subr.mxu0 0.0
        %883 = vmatpush1.msra.mxu0 %v516
        %884 = vmatprep.subr.mxu0 0.0
        %885 = vmatpush1.msra.mxu0 %v517
        %886 = vmatprep.subr.mxu0 0.0
        %887 = vmatpush1.msra.mxu0 %v518
        %888 = vmatprep.subr.mxu0 0.0
        %889 = vmatpush1.msra.mxu0 %v519
        %890 = vmatprep.subr.mxu0 0.0
        %891 = vmatpush1.msra.mxu0 %v520
        %892 = vmatprep.subr.mxu0 0.0
        %893 = vmatpush1.msra.mxu0 %v521
        %894 = vmatprep.subr.mxu0 0.0
        %895 = vmatpush1.msra.mxu0 %v522
        %896 = vmatprep.subr.mxu0 0.0
        %897 = vmatpush1.msra.mxu0 %v523
        %898 = vmatprep.subr.mxu0 0.0
        %899 = vmatpush1.msra.mxu0 %v524
        %900 = vmatprep.subr.mxu0 0.0
        %901 = vmatpush1.msra.mxu0 %v525
        %902 = vmatprep.subr.mxu0 0.0
        %903 = vmatpush1.msra.mxu0 %v526
        %904 = vmatprep.subr.mxu0 0.0
        %905 = vmatpush1.msra.mxu0 %v527
        %906 = vmatprep.subr.mxu0 0.0
        %907 = vmatpush1.msra.mxu0 %v528
        %908 = vmatprep.subr.mxu0 0.0
        %909 = vmatpush1.msra.mxu0 %v529
        %910 = vmatprep.subr.mxu0 0.0
        %911 = vmatpush1.msra.mxu0 %v530
        %912 = vmatprep.subr.mxu0 0.0
        %913 = vmatpush1.msra.mxu0 %v531
        %914 = vmatprep.subr.mxu0 0.0
        %915 = vmatpush1.msra.mxu0 %v532
        %916 = vmatprep.subr.mxu0 0.0
        %917 = vmatpush1.msra.mxu0 %v533
        %918 = vmatprep.subr.mxu0 0.0
        %919 = vmatpush1.msra.mxu0 %v534
        %920 = vmatprep.subr.mxu0 0.0
        %921 = vmatpush1.msra.mxu0 %v535
        %922 = vmatprep.subr.mxu0 0.0
        %923 = vmatpush1.msra.mxu0 %v536
        %924 = vmatprep.subr.mxu0 0.0
        %925 = vmatpush1.msra.mxu0 %v537
        %926 = vmatprep.subr.mxu0 0.0
        %927 = vmatpush1.msra.mxu0 %v538
        %928 = vmatprep.mubr.f32.mxu0 %v862
        %929 = vmatmul.mubr.f32.gmra.mrb[0].mxu0 %v277
        %v930 = vpop.f32.mrb[0].mxu0
        %v931 = vadd.f32 0.0, %v930
        %v932 = vpop.f32.mrb[0].mxu0
        %933 = vdwg.mxu0
        %v934 = vmul.f32 %v931, 0.0625
        %935 = vmatprep.subr.mxu0 0.0
        %936 = vmatpush1.msra.mxu0 %v829
        %937 = vmatprep.subr.mxu0 0.0
        %938 = vmatpush1.msra.mxu0 %v830
        %939 = vmatprep.subr.mxu0 0.0
        %940 = vmatpush1.msra.mxu0 %v831
        %941 = vmatprep.subr.mxu0 0.0
        %942 = vmatpush1.msra.mxu0 %v832
        %943 = vmatprep.subr.mxu0 0.0
        %944 = vmatpush1.msra.mxu0 %v833
        %945 = vmatprep.subr.mxu0 0.0
        %946 = vmatpush1.msra.mxu0 %v834
        %947 = vmatprep.subr.mxu0 0.0
        %948 = vmatpush1.msra.mxu0 %v835
        %949 = vmatprep.subr.mxu0 0.0
        %950 = vmatpush1.msra.mxu0 %v836
        %951 = vmatprep.subr.mxu0 0.0
        %952 = vmatpush1.msra.mxu0 %v837
        %953 = vmatprep.subr.mxu0 0.0
        %954 = vmatpush1.msra.mxu0 %v838
        %955 = vmatprep.subr.mxu0 0.0
        %956 = vmatpush1.msra.mxu0 %v839
        %957 = vmatprep.subr.mxu0 0.0
        %958 = vmatpush1.msra.mxu0 %v840
        %959 = vmatprep.subr.mxu0 0.0
        %960 = vmatpush1.msra.mxu0 %v841
        %961 = vmatprep.subr.mxu0 0.0
        %962 = vmatpush1.msra.mxu0 %v842
        %963 = vmatprep.subr.mxu0 0.0
        %964 = vmatpush1.msra.mxu0 %v843
        %965 = vmatprep.subr.mxu0 0.0
        %966 = vmatpush1.msra.mxu0 %v844
        %967 = vmatprep.subr.mxu0 0.0
        %968 = vmatpush1.msra.mxu0 %v845
        %969 = vmatprep.subr.mxu0 0.0
        %970 = vmatpush1.msra.mxu0 %v846
        %971 = vmatprep.subr.mxu0 0.0
        %972 = vmatpush1.msra.mxu0 %v847
        %973 = vmatprep.subr.mxu0 0.0
        %974 = vmatpush1.msra.mxu0 %v848
        %975 = vmatprep.subr.mxu0 0.0
        %976 = vmatpush1.msra.mxu0 %v849
        %977 = vmatprep.subr.mxu0 0.0
        %978 = vmatpush1.msra.mxu0 %v850
        %979 = vmatprep.subr.mxu0 0.0
        %980 = vmatpush1.msra.mxu0 %v851
        %981 = vmatprep.subr.mxu0 0.0
        %982 = vmatpush1.msra.mxu0 %v852
        %983 = vmatprep.subr.mxu0 0.0
        %984 = vmatpush1.msra.mxu0 %v853
        %985 = vmatprep.subr.mxu0 0.0
        %986 = vmatpush1.msra.mxu0 %v854
        %987 = vmatprep.subr.mxu0 0.0
        %988 = vmatpush1.msra.mxu0 %v855
        %989 = vmatprep.subr.mxu0 0.0
        %990 = vmatpush1.msra.mxu0 %v856
        %991 = vmatprep.subr.mxu0 0.0
        %992 = vmatpush1.msra.mxu0 %v857
        %993 = vmatprep.subr.mxu0 0.0
        %994 = vmatpush1.msra.mxu0 %v858
        %995 = vmatprep.subr.mxu0 0.0
        %996 = vmatpush1.msra.mxu0 %v859
        %997 = vmatprep.subr.mxu0 0.0
        %998 = vmatpush1.msra.mxu0 %v860
        %999 = vmatprep.mubr.f32.mxu0 %v862
        %1000 = vmatmul.mubr.f32.gmra.mrb[0].mxu0 %v277
        %v1001 = vpop.f32.mrb[0].mxu0
        %v1002 = vadd.f32 0.0, %v1001
        %v1003 = vpop.f32.mrb[0].mxu0
        %1004 = vdwg.mxu0
        %v1005 = vmul.f32 %v1002, 0.0625
        %v1006 = vld [vmem:[%s1] sm:$0xff]
        %v1007 = vld [vmem:[%s2] sm:$0xff]
        %v1008 = vld [vmem:[%s3] sm:$0xf]
        %v1009 = vld [vmem:[%s4] sm:$0xf]
        %1011 = vset.pattern.permute.xlu0 0
        %1012 = vperm.xlu0 %1011, %v1007
        %v1013 = vpop.permute.xlu0 %1012
        %vm1015 = vcmask 31744
        %v1017 = vsel %vm1015, %v1006, 0
        %vm1019 = vcmask 1043456
        %v1021 = vsel %vm1019, %v934, 0
        %1023 = vmatprep.subr.mxu0 0.0
        %1024 = vmatpush1.msra.mxu0 %v1021
        %1025 = vmatprep.subr.mxu0 0.0
        %1026 = vmatpush1.msra.mxu0 0.0
        %1027 = vmatprep.subr.mxu0 0.0
        %1028 = vmatpush1.msra.mxu0 0.0
        %1029 = vmatprep.subr.mxu0 0.0
        %1030 = vmatpush1.msra.mxu0 0.0
        %1031 = vmatprep.subr.mxu0 0.0
        %1032 = vmatpush1.msra.mxu0 0.0
        %1033 = vmatprep.subr.mxu0 0.0
        %1034 = vmatpush1.msra.mxu0 0.0
        %1035 = vmatprep.subr.mxu0 0.0
        %1036 = vmatpush1.msra.mxu0 0.0
        %1037 = vmatprep.subr.mxu0 0.0
        %1038 = vmatpush1.msra.mxu0 0.0
        %1039 = vmatprep.subr.mxu0 0.0
        %1040 = vmatpush1.msra.mxu0 0.0
        %1041 = vmatprep.subr.mxu0 0.0
        %1042 = vmatpush1.msra.mxu0 0.0
        %1043 = vmatprep.subr.mxu0 0.0
        %1044 = vmatpush1.msra.mxu0 0.0
        %1045 = vmatprep.subr.mxu0 0.0
        %1046 = vmatpush1.msra.mxu0 0.0
        %1047 = vmatprep.subr.mxu0 0.0
        %1048 = vmatpush1.msra.mxu0 0.0
        %1049 = vmatprep.subr.mxu0 0.0
        %1050 = vmatpush1.msra.mxu0 0.0
        %1051 = vmatprep.subr.mxu0 0.0
        %1052 = vmatpush1.msra.mxu0 0.0
        %1053 = vmatprep.subr.mxu0 0.0
        %1054 = vmatpush1.msra.mxu0 0.0
        %1055 = vmatprep.subr.mxu0 0.0
        %1056 = vmatpush1.msra.mxu0 0.0
        %1057 = vmatprep.subr.mxu0 0.0
        %1058 = vmatpush1.msra.mxu0 0.0
        %1059 = vmatprep.subr.mxu0 0.0
        %1060 = vmatpush1.msra.mxu0 0.0
        %1061 = vmatprep.subr.mxu0 0.0
        %1062 = vmatpush1.msra.mxu0 0.0
        %1063 = vmatprep.subr.mxu0 0.0
        %1064 = vmatpush1.msra.mxu0 0.0
        %1065 = vmatprep.subr.mxu0 0.0
        %1066 = vmatpush1.msra.mxu0 0.0
        %1067 = vmatprep.subr.mxu0 0.0
        %1068 = vmatpush1.msra.mxu0 0.0
        %1069 = vmatprep.subr.mxu0 0.0
        %1070 = vmatpush1.msra.mxu0 0.0
        %1071 = vmatprep.subr.mxu0 0.0
        %1072 = vmatpush1.msra.mxu0 0.0
        %1073 = vmatprep.subr.mxu0 0.0
        %1074 = vmatpush1.msra.mxu0 0.0
        %1075 = vmatprep.subr.mxu0 0.0
        %1076 = vmatpush1.msra.mxu0 0.0
        %1077 = vmatprep.subr.mxu0 0.0
        %1078 = vmatpush1.msra.mxu0 0.0
        %1079 = vmatprep.subr.mxu0 0.0
        %1080 = vmatpush1.msra.mxu0 0.0
        %1081 = vmatprep.subr.mxu0 0.0
        %1082 = vmatpush1.msra.mxu0 0.0
        %1083 = vmatprep.subr.mxu0 0.0
        %1084 = vmatpush1.msra.mxu0 0.0
        %1085 = vmatprep.subr.mxu0 0.0
        %1086 = vmatpush1.msra.mxu0 0.0
        %1087 = vmatprep.mubr.f32.mxu0 0.0
        %1088 = vmatmul.mubr.f32.gmra.mrb[0].mxu0 %v1017
        %v1089 = vpop.f32.mrb[0].mxu0
        %v1090 = vadd.f32 %v1013, %v1089
        %v1091 = vpop.f32.mrb[0].mxu0
        %1092 = vdwg.mxu0
        %v1093 = vadd.f32 %v1090, 3.0
        %v1094 = vmax.f32 %v1093, 0.0
        %v1095 = vmin.f32 %v1094, 6.0
        %v1096 = vmul.f32 %v1095, 0.16666667
        %v1097 = vmul.f32 %v1090, %v1096
        %1099 = vset.pattern.permute.xlu0 0
        %1100 = vperm.xlu0 %1099, %v1009
        %v1101 = vpop.permute.xlu0 %1100
        %vm1103 = vcmask 64512
        %v1105 = vsel %vm1103, %v1008, 0
        %1107 = vmatprep.subr.mxu0 0.0
        %1108 = vmatpush1.msra.mxu0 %v1097
        %1109 = vmatprep.subr.mxu0 0.0
        %1110 = vmatpush1.msra.mxu0 0.0
        %1111 = vmatprep.subr.mxu0 0.0
        %1112 = vmatpush1.msra.mxu0 0.0
        %1113 = vmatprep.subr.mxu0 0.0
        %1114 = vmatpush1.msra.mxu0 0.0
        %1115 = vmatprep.subr.mxu0 0.0
        %1116 = vmatpush1.msra.mxu0 0.0
        %1117 = vmatprep.subr.mxu0 0.0
        %1118 = vmatpush1.msra.mxu0 0.0
        %1119 = vmatprep.subr.mxu0 0.0
        %1120 = vmatpush1.msra.mxu0 0.0
        %1121 = vmatprep.subr.mxu0 0.0
        %1122 = vmatpush1.msra.mxu0 0.0
        %1123 = vmatprep.subr.mxu0 0.0
        %1124 = vmatpush1.msra.mxu0 0.0
        %1125 = vmatprep.subr.mxu0 0.0
        %1126 = vmatpush1.msra.mxu0 0.0
        %1127 = vmatprep.subr.mxu0 0.0
        %1128 = vmatpush1.msra.mxu0 0.0
        %1129 = vmatprep.subr.mxu0 0.0
        %1130 = vmatpush1.msra.mxu0 0.0
        %1131 = vmatprep.subr.mxu0 0.0
        %1132 = vmatpush1.msra.mxu0 0.0
        %1133 = vmatprep.subr.mxu0 0.0
        %1134 = vmatpush1.msra.mxu0 0.0
        %1135 = vmatprep.subr.mxu0 0.0
        %1136 = vmatpush1.msra.mxu0 0.0
        %1137 = vmatprep.subr.mxu0 0.0
        %1138 = vmatpush1.msra.mxu0 0.0
        %1139 = vmatprep.subr.mxu0 0.0
        %1140 = vmatpush1.msra.mxu0 0.0
        %1141 = vmatprep.subr.mxu0 0.0
        %1142 = vmatpush1.msra.mxu0 0.0
        %1143 = vmatprep.subr.mxu0 0.0
        %1144 = vmatpush1.msra.mxu0 0.0
        %1145 = vmatprep.subr.mxu0 0.0
        %1146 = vmatpush1.msra.mxu0 0.0
        %1147 = vmatprep.subr.mxu0 0.0
        %1148 = vmatpush1.msra.mxu0 0.0
        %1149 = vmatprep.subr.mxu0 0.0
        %1150 = vmatpush1.msra.mxu0 0.0
        %1151 = vmatprep.subr.mxu0 0.0
        %1152 = vmatpush1.msra.mxu0 0.0
        %1153 = vmatprep.subr.mxu0 0.0
        %1154 = vmatpush1.msra.mxu0 0.0
        %1155 = vmatprep.subr.mxu0 0.0
        %1156 = vmatpush1.msra.mxu0 0.0
        %1157 = vmatprep.subr.mxu0 0.0
        %1158 = vmatpush1.msra.mxu0 0.0
        %1159 = vmatprep.subr.mxu0 0.0
        %1160 = vmatpush1.msra.mxu0 0.0
        %1161 = vmatprep.subr.mxu0 0.0
        %1162 = vmatpush1.msra.mxu0 0.0
        %1163 = vmatprep.subr.mxu0 0.0
        %1164 = vmatpush1.msra.mxu0 0.0
        %1165 = vmatprep.subr.mxu0 0.0
        %1166 = vmatpush1.msra.mxu0 0.0
        %1167 = vmatprep.subr.mxu0 0.0
        %1168 = vmatpush1.msra.mxu0 0.0
        %1169 = vmatprep.subr.mxu0 0.0
        %1170 = vmatpush1.msra.mxu0 0.0
        %1171 = vmatprep.mubr.f32.mxu0 0.0
        %1172 = vmatmul.mubr.f32.gmra.mrb[0].mxu0 %v1105
        %v1173 = vpop.f32.mrb[0].mxu0
        %v1174 = vadd.f32 %v1101, %v1173
        %v1175 = vpop.f32.mrb[0].mxu0
        %1176 = vdwg.mxu0
        %v1177 = vxor.u32 %v1174, 2147483648
        %v1178 = vmul.f32 %v1177, 1.442695
        %v1179 = vpow.pop %v1178
        %v1180 = vadd.f32 %v1179, 1.0
        %v1181 = vrcp.pop %v1180
        %v1182 = vmul.f32 1.0, %v1181
        %v1183 = vld [vmem:[%s5] sm:$0xf]
        %v1184 = vld [vmem:[%s6] sm:$0xf]
        %v1186 = vsel %vm1019, %v1005, 0
        %1188 = vmatprep.subr.mxu0 0.0
        %1189 = vmatpush1.msra.mxu0 %v1186
        %1190 = vmatprep.subr.mxu0 0.0
        %1191 = vmatpush1.msra.mxu0 0.0
        %1192 = vmatprep.subr.mxu0 0.0
        %1193 = vmatpush1.msra.mxu0 0.0
        %1194 = vmatprep.subr.mxu0 0.0
        %1195 = vmatpush1.msra.mxu0 0.0
        %1196 = vmatprep.subr.mxu0 0.0
        %1197 = vmatpush1.msra.mxu0 0.0
        %1198 = vmatprep.subr.mxu0 0.0
        %1199 = vmatpush1.msra.mxu0 0.0
        %1200 = vmatprep.subr.mxu0 0.0
        %1201 = vmatpush1.msra.mxu0 0.0
        %1202 = vmatprep.subr.mxu0 0.0
        %1203 = vmatpush1.msra.mxu0 0.0
        %1204 = vmatprep.subr.mxu0 0.0
        %1205 = vmatpush1.msra.mxu0 0.0
        %1206 = vmatprep.subr.mxu0 0.0
        %1207 = vmatpush1.msra.mxu0 0.0
        %1208 = vmatprep.subr.mxu0 0.0
        %1209 = vmatpush1.msra.mxu0 0.0
        %1210 = vmatprep.subr.mxu0 0.0
        %1211 = vmatpush1.msra.mxu0 0.0
        %1212 = vmatprep.subr.mxu0 0.0
        %1213 = vmatpush1.msra.mxu0 0.0
        %1214 = vmatprep.subr.mxu0 0.0
        %1215 = vmatpush1.msra.mxu0 0.0
        %1216 = vmatprep.subr.mxu0 0.0
        %1217 = vmatpush1.msra.mxu0 0.0
        %1218 = vmatprep.subr.mxu0 0.0
        %1219 = vmatpush1.msra.mxu0 0.0
        %1220 = vmatprep.subr.mxu0 0.0
        %1221 = vmatpush1.msra.mxu0 0.0
        %1222 = vmatprep.subr.mxu0 0.0
        %1223 = vmatpush1.msra.mxu0 0.0
        %1224 = vmatprep.subr.mxu0 0.0
        %1225 = vmatpush1.msra.mxu0 0.0
        %1226 = vmatprep.subr.mxu0 0.0
        %1227 = vmatpush1.msra.mxu0 0.0
        %1228 = vmatprep.subr.mxu0 0.0
        %1229 = vmatpush1.msra.mxu0 0.0
        %1230 = vmatprep.subr.mxu0 0.0
        %1231 = vmatpush1.msra.mxu0 0.0
        %1232 = vmatprep.subr.mxu0 0.0
        %1233 = vmatpush1.msra.mxu0 0.0
        %1234 = vmatprep.subr.mxu0 0.0
        %1235 = vmatpush1.msra.mxu0 0.0
        %1236 = vmatprep.subr.mxu0 0.0
        %1237 = vmatpush1.msra.mxu0 0.0
        %1238 = vmatprep.subr.mxu0 0.0
        %1239 = vmatpush1.msra.mxu0 0.0
        %1240 = vmatprep.subr.mxu0 0.0
        %1241 = vmatpush1.msra.mxu0 0.0
        %1242 = vmatprep.subr.mxu0 0.0
        %1243 = vmatpush1.msra.mxu0 0.0
        %1244 = vmatprep.subr.mxu0 0.0
        %1245 = vmatpush1.msra.mxu0 0.0
        %1246 = vmatprep.subr.mxu0 0.0
        %1247 = vmatpush1.msra.mxu0 0.0
        %1248 = vmatprep.subr.mxu0 0.0
        %1249 = vmatpush1.msra.mxu0 0.0
        %1250 = vmatprep.subr.mxu0 0.0
        %1251 = vmatpush1.msra.mxu0 0.0
        %1252 = vmatprep.mubr.f32.mxu0 0.0
        %1253 = vmatmul.mubr.f32.gmra.mrb[0].mxu0 %v1017
        %v1254 = vpop.f32.mrb[0].mxu0
        %v1255 = vadd.f32 %v1013, %v1254
        %v1256 = vpop.f32.mrb[0].mxu0
        %1257 = vdwg.mxu0
        %v1258 = vadd.f32 %v1255, 3.0
        %v1259 = vmax.f32 %v1258, 0.0
        %v1260 = vmin.f32 %v1259, 6.0
        %v1261 = vmul.f32 %v1260, 0.16666667
        %v1262 = vmul.f32 %v1255, %v1261
        %1264 = vset.pattern.permute.xlu0 0
        %1265 = vperm.xlu0 %1264, %v1184
        %v1266 = vpop.permute.xlu0 %1265
        %v1269 = vsel %vm1103, %v1183, 0
        %1271 = vmatprep.subr.mxu0 0.0
        %1272 = vmatpush1.msra.mxu0 %v1262
        %1273 = vmatprep.subr.mxu0 0.0
        %1274 = vmatpush1.msra.mxu0 0.0
        %1275 = vmatprep.subr.mxu0 0.0
        %1276 = vmatpush1.msra.mxu0 0.0
        %1277 = vmatprep.subr.mxu0 0.0
        %1278 = vmatpush1.msra.mxu0 0.0
        %1279 = vmatprep.subr.mxu0 0.0
        %1280 = vmatpush1.msra.mxu0 0.0
        %1281 = vmatprep.subr.mxu0 0.0
        %1282 = vmatpush1.msra.mxu0 0.0
        %1283 = vmatprep.subr.mxu0 0.0
        %1284 = vmatpush1.msra.mxu0 0.0
        %1285 = vmatprep.subr.mxu0 0.0
        %1286 = vmatpush1.msra.mxu0 0.0
        %1287 = vmatprep.subr.mxu0 0.0
        %1288 = vmatpush1.msra.mxu0 0.0
        %1289 = vmatprep.subr.mxu0 0.0
        %1290 = vmatpush1.msra.mxu0 0.0
        %1291 = vmatprep.subr.mxu0 0.0
        %1292 = vmatpush1.msra.mxu0 0.0
        %1293 = vmatprep.subr.mxu0 0.0
        %1294 = vmatpush1.msra.mxu0 0.0
        %1295 = vmatprep.subr.mxu0 0.0
        %1296 = vmatpush1.msra.mxu0 0.0
        %1297 = vmatprep.subr.mxu0 0.0
        %1298 = vmatpush1.msra.mxu0 0.0
        %1299 = vmatprep.subr.mxu0 0.0
        %1300 = vmatpush1.msra.mxu0 0.0
        %1301 = vmatprep.subr.mxu0 0.0
        %1302 = vmatpush1.msra.mxu0 0.0
        %1303 = vmatprep.subr.mxu0 0.0
        %1304 = vmatpush1.msra.mxu0 0.0
        %1305 = vmatprep.subr.mxu0 0.0
        %1306 = vmatpush1.msra.mxu0 0.0
        %1307 = vmatprep.subr.mxu0 0.0
        %1308 = vmatpush1.msra.mxu0 0.0
        %1309 = vmatprep.subr.mxu0 0.0
        %1310 = vmatpush1.msra.mxu0 0.0
        %1311 = vmatprep.subr.mxu0 0.0
        %1312 = vmatpush1.msra.mxu0 0.0
        %1313 = vmatprep.subr.mxu0 0.0
        %1314 = vmatpush1.msra.mxu0 0.0
        %1315 = vmatprep.subr.mxu0 0.0
        %1316 = vmatpush1.msra.mxu0 0.0
        %1317 = vmatprep.subr.mxu0 0.0
        %1318 = vmatpush1.msra.mxu0 0.0
        %1319 = vmatprep.subr.mxu0 0.0
        %1320 = vmatpush1.msra.mxu0 0.0
        %1321 = vmatprep.subr.mxu0 0.0
        %1322 = vmatpush1.msra.mxu0 0.0
        %1323 = vmatprep.subr.mxu0 0.0
        %1324 = vmatpush1.msra.mxu0 0.0
        %1325 = vmatprep.subr.mxu0 0.0
        %1326 = vmatpush1.msra.mxu0 0.0
        %1327 = vmatprep.subr.mxu0 0.0
        %1328 = vmatpush1.msra.mxu0 0.0
        %1329 = vmatprep.subr.mxu0 0.0
        %1330 = vmatpush1.msra.mxu0 0.0
        %1331 = vmatprep.subr.mxu0 0.0
        %1332 = vmatpush1.msra.mxu0 0.0
        %1333 = vmatprep.subr.mxu0 0.0
        %1334 = vmatpush1.msra.mxu0 0.0
        %1335 = vmatprep.mubr.f32.mxu0 0.0
        %1336 = vmatmul.mubr.f32.gmra.mrb[0].mxu0 %v1269
        %v1337 = vpop.f32.mrb[0].mxu0
        %v1338 = vadd.f32 %v1266, %v1337
        %v1339 = vpop.f32.mrb[0].mxu0
        %1340 = vdwg.mxu0
        %v1341 = vxor.u32 %v1338, 2147483648
        %v1342 = vmul.f32 %v1341, 1.442695
        %v1343 = vpow.pop %v1342
        %v1344 = vadd.f32 %v1343, 1.0
        %v1345 = vrcp.pop %v1344
        %v1346 = vmul.f32 1.0, %v1345
        %v1347 = vadd.s32 %v312, 128
        %v1348 = vmul.u32 %v279, 16
        %v1349 = vmul.u32 %v280, 16
        %vm1350 = vcmp.ge.s32.totalorder %v312, %v1348
        %vm1351 = vcmp.ge.s32.totalorder %v1347, %v1348
        %vm1352 = vcmp.ge.s32.totalorder %v312, %v1349
        %vm1353 = vcmp.ge.s32.totalorder %v1347, %v1349
        %v1354 = vsel %vm1350, 1, 0
        %v1355 = vsel %vm1351, 1, 0
        %v1356 = vsel %vm1352, 1, 0
        %v1357 = vsel %vm1353, 1, 0
        %v1358 = vcvt.s32.f32 %v1354
        %v1359 = vcvt.s32.f32 %v1355
        %v1360 = vcvt.s32.f32 %v1356
        %v1361 = vcvt.s32.f32 %v1357
        %v1362 = vadd.s32 %v1348, 16
        %v1363 = vadd.s32 %v1349, 16
        %vm1364 = vcmp.lt.s32.totalorder %v312, %v1362
        %vm1365 = vcmp.lt.s32.totalorder %v1347, %v1362
        %vm1366 = vcmp.lt.s32.totalorder %v312, %v1363
        %vm1367 = vcmp.lt.s32.totalorder %v1347, %v1363
        %v1368 = vsel %vm1364, 1, 0
        %v1369 = vsel %vm1365, 1, 0
        %v1370 = vsel %vm1366, 1, 0
        %v1371 = vsel %vm1367, 1, 0
        %v1372 = vcvt.s32.f32 %v1368
        %v1373 = vcvt.s32.f32 %v1369
        %v1374 = vcvt.s32.f32 %v1370
        %v1375 = vcvt.s32.f32 %v1371
        %v1376 = vmul.f32 %v1358, %v1372
        %v1377 = vmul.f32 %v1359, %v1373
        %v1378 = vmul.f32 %v1360, %v1374
        %v1379 = vmul.f32 %v1361, %v1375
        %v1380 = vadd.f32 %v1358, %v1360
        %v1381 = vrot.slane %v1380, 4
        %v1382 = vadd.f32 %v1380, %v1381
        %v1383 = vrot.slane %v1382, 2
        %v1384 = vadd.f32 %v1382, %v1383
        %v1385 = vrot.slane %v1384, 1
        %v1386 = vadd.f32 %v1384, %v1385
        %v1387 = vadd.f32 %v1359, %v1361
        %v1388 = vrot.slane %v1387, 4
        %v1389 = vadd.f32 %v1387, %v1388
        %v1390 = vrot.slane %v1389, 2
        %v1391 = vadd.f32 %v1389, %v1390
        %v1392 = vrot.slane %v1391, 1
        %v1393 = vadd.f32 %v1391, %v1392
        %v1394 = vsub.f32 %v1386, 1.0
        %v1395 = vsub.f32 %v1393, 1.0
        %v1396 = vcvt.s32.f32 %v1347
        %v1397 = vmul.f32 %v1394, 16.0
        %v1398 = vmul.f32 %v1395, 16.0
        %v1399 = vsub.f32 %v764, %v1397
        %v1400 = vsub.f32 %v1396, %v1398
        %vm1401 = vcmp.eq.f32.partialorder %v1399, %v668
        %vm1402 = vcmp.eq.f32.partialorder %v1400, %v668
        %vm1403 = vcmp.eq.f32.partialorder %v1399, %v669
        %vm1404 = vcmp.eq.f32.partialorder %v1400, %v669
        %v1405 = vsel %vm1401, 1, 0
        %v1406 = vsel %vm1402, 1, 0
        %v1407 = vsel %vm1403, 1, 0
        %v1408 = vsel %vm1404, 1, 0
        %v1409 = vcvt.s32.f32 %v1405
        %v1410 = vcvt.s32.f32 %v1406
        %v1411 = vcvt.s32.f32 %v1407
        %v1412 = vcvt.s32.f32 %v1408
        %v1414 = vsel %vm539, %v1182, 0
        %1416 = vmatprep.subr.mxu0 %v1377
        %1417 = vmatpush1.msra.mxu0 %v1376
        %1418 = vmatprep.subr.mxu0 %v1379
        %1419 = vmatpush1.msra.mxu0 %v1378
        %1420 = vmatprep.subr.mxu0 0.0
        %1421 = vmatpush1.msra.mxu0 0.0
        %1422 = vmatprep.subr.mxu0 0.0
        %1423 = vmatpush1.msra.mxu0 0.0
        %1424 = vmatprep.subr.mxu0 0.0
        %1425 = vmatpush1.msra.mxu0 0.0
        %1426 = vmatprep.subr.mxu0 0.0
        %1427 = vmatpush1.msra.mxu0 0.0
        %1428 = vmatprep.subr.mxu0 0.0
        %1429 = vmatpush1.msra.mxu0 0.0
        %1430 = vmatprep.subr.mxu0 0.0
        %1431 = vmatpush1.msra.mxu0 0.0
        %1432 = vmatprep.subr.mxu0 0.0
        %1433 = vmatpush1.msra.mxu0 0.0
        %1434 = vmatprep.subr.mxu0 0.0
        %1435 = vmatpush1.msra.mxu0 0.0
        %1436 = vmatprep.subr.mxu0 0.0
        %1437 = vmatpush1.msra.mxu0 0.0
        %1438 = vmatprep.subr.mxu0 0.0
        %1439 = vmatpush1.msra.mxu0 0.0
        %1440 = vmatprep.subr.mxu0 0.0
        %1441 = vmatpush1.msra.mxu0 0.0
        %1442 = vmatprep.subr.mxu0 0.0
        %1443 = vmatpush1.msra.mxu0 0.0
        %1444 = vmatprep.subr.mxu0 0.0
        %1445 = vmatpush1.msra.mxu0 0.0
        %1446 = vmatprep.subr.mxu0 0.0
        %1447 = vmatpush1.msra.mxu0 0.0
        %1448 = vmatprep.subr.mxu0 0.0
        %1449 = vmatpush1.msra.mxu0 0.0
        %1450 = vmatprep.subr.mxu0 0.0
        %1451 = vmatpush1.msra.mxu0 0.0
        %1452 = vmatprep.subr.mxu0 0.0
        %1453 = vmatpush1.msra.mxu0 0.0
        %1454 = vmatprep.subr.mxu0 0.0
        %1455 = vmatpush1.msra.mxu0 0.0
        %1456 = vmatprep.subr.mxu0 0.0
        %1457 = vmatpush1.msra.mxu0 0.0
        %1458 = vmatprep.subr.mxu0 0.0
        %1459 = vmatpush1.msra.mxu0 0.0
        %1460 = vmatprep.subr.mxu0 0.0
        %1461 = vmatpush1.msra.mxu0 0.0
        %1462 = vmatprep.subr.mxu0 0.0
        %1463 = vmatpush1.msra.mxu0 0.0
        %1464 = vmatprep.subr.mxu0 0.0
        %1465 = vmatpush1.msra.mxu0 0.0
        %1466 = vmatprep.subr.mxu0 0.0
        %1467 = vmatpush1.msra.mxu0 0.0
        %1468 = vmatprep.subr.mxu0 0.0
        %1469 = vmatpush1.msra.mxu0 0.0
        %1470 = vmatprep.subr.mxu0 0.0
        %1471 = vmatpush1.msra.mxu0 0.0
        %1472 = vmatprep.subr.mxu0 0.0
        %1473 = vmatpush1.msra.mxu0 0.0
        %1474 = vmatprep.subr.mxu0 0.0
        %1475 = vmatpush1.msra.mxu0 0.0
        %1476 = vmatprep.subr.mxu0 0.0
        %1477 = vmatpush1.msra.mxu0 0.0
        %1478 = vmatprep.subr.mxu0 0.0
        %1479 = vmatpush1.msra.mxu0 0.0
        %1480 = vmatprep.mubr.f32.mxu0 0.0
        %1481 = vmatmul.mubr.f32.gmra.mrb[0].mxu0 %v1414
        %v1482 = vpop.f32.mrb[0].mxu0
        %v1483 = vadd.f32 0.0, %v1482
        %v1484 = vpop.f32.mrb[0].mxu0
        %v1485 = vadd.f32 0.0, %v1484
        %1486 = vdwg.mxu0
        %v1488 = vsel %vm539, %v1346, 0
        %1490 = vmatprep.subr.mxu0 %v1410
        %1491 = vmatpush1.msra.mxu0 %v1409
        %1492 = vmatprep.subr.mxu0 %v1412
        %1493 = vmatpush1.msra.mxu0 %v1411
        %1494 = vmatprep.subr.mxu0 0.0
        %1495 = vmatpush1.msra.mxu0 0.0
        %1496 = vmatprep.subr.mxu0 0.0
        %1497 = vmatpush1.msra.mxu0 0.0
        %1498 = vmatprep.subr.mxu0 0.0
        %1499 = vmatpush1.msra.mxu0 0.0
        %1500 = vmatprep.subr.mxu0 0.0
        %1501 = vmatpush1.msra.mxu0 0.0
        %1502 = vmatprep.subr.mxu0 0.0
        %1503 = vmatpush1.msra.mxu0 0.0
        %1504 = vmatprep.subr.mxu0 0.0
        %1505 = vmatpush1.msra.mxu0 0.0
        %1506 = vmatprep.subr.mxu0 0.0
        %1507 = vmatpush1.msra.mxu0 0.0
        %1508 = vmatprep.subr.mxu0 0.0
        %1509 = vmatpush1.msra.mxu0 0.0
        %1510 = vmatprep.subr.mxu0 0.0
        %1511 = vmatpush1.msra.mxu0 0.0
        %1512 = vmatprep.subr.mxu0 0.0
        %1513 = vmatpush1.msra.mxu0 0.0
        %1514 = vmatprep.subr.mxu0 0.0
        %1515 = vmatpush1.msra.mxu0 0.0
        %1516 = vmatprep.subr.mxu0 0.0
        %1517 = vmatpush1.msra.mxu0 0.0
        %1518 = vmatprep.subr.mxu0 0.0
        %1519 = vmatpush1.msra.mxu0 0.0
        %1520 = vmatprep.subr.mxu0 0.0
        %1521 = vmatpush1.msra.mxu0 0.0
        %1522 = vmatprep.subr.mxu0 0.0
        %1523 = vmatpush1.msra.mxu0 0.0
        %1524 = vmatprep.subr.mxu0 0.0
        %1525 = vmatpush1.msra.mxu0 0.0
        %1526 = vmatprep.subr.mxu0 0.0
        %1527 = vmatpush1.msra.mxu0 0.0
        %1528 = vmatprep.subr.mxu0 0.0
        %1529 = vmatpush1.msra.mxu0 0.0
        %1530 = vmatprep.subr.mxu0 0.0
        %1531 = vmatpush1.msra.mxu0 0.0
        %1532 = vmatprep.subr.mxu0 0.0
        %1533 = vmatpush1.msra.mxu0 0.0
        %1534 = vmatprep.subr.mxu0 0.0
        %1535 = vmatpush1.msra.mxu0 0.0
        %1536 = vmatprep.subr.mxu0 0.0
        %1537 = vmatpush1.msra.mxu0 0.0
        %1538 = vmatprep.subr.mxu0 0.0
        %1539 = vmatpush1.msra.mxu0 0.0
        %1540 = vmatprep.subr.mxu0 0.0
        %1541 = vmatpush1.msra.mxu0 0.0
        %1542 = vmatprep.subr.mxu0 0.0
        %1543 = vmatpush1.msra.mxu0 0.0
        %1544 = vmatprep.subr.mxu0 0.0
        %1545 = vmatpush1.msra.mxu0 0.0
        %1546 = vmatprep.subr.mxu0 0.0
        %1547 = vmatpush1.msra.mxu0 0.0
        %1548 = vmatprep.subr.mxu0 0.0
        %1549 = vmatpush1.msra.mxu0 0.0
        %1550 = vmatprep.subr.mxu0 0.0
        %1551 = vmatpush1.msra.mxu0 0.0
        %1552 = vmatprep.subr.mxu0 0.0
        %1553 = vmatpush1.msra.mxu0 0.0
        %1554 = vmatprep.mubr.f32.mxu0 0.0
        %1555 = vmatmul.mubr.f32.gmra.mrb[0].mxu0 %v1488
        %v1556 = vpop.f32.mrb[0].mxu0
        %v1557 = vadd.f32 0.0, %v1556
        %v1558 = vpop.f32.mrb[0].mxu0
        %v1559 = vadd.f32 0.0, %v1558
        %1560 = vdwg.mxu0
        %v1561 = vmul.f32 %v1483, %v1557
        %v1562 = vmul.f32 %v1485, %v1559
        %v1565 = vcombine.low %v1561, %v1562
        %v1567 = vmul.f32 %v277, %v1565
        %1568 = vst [vmem:[%s271] sm:$0xff] %v1567
        %s1569 = sand.u32 %s181, 1
        %s1570 = scalar_lea.sflag [#allocation3], %s1569
        %s1571 = sand.u32 %s181, 1
        %s1572 = smul.addr %s1571, 8
        %s1573 = scalar_lea.vmem [#allocation2], %s1572
        // Predicated region
        $region49: #{tpu_custom_call.1} parent=47 // pred_check
          %p1574 = pneg %p191
        $region50: #{tpu_custom_call.1} parent=47 // pred_check_branch
          %1576 = sbr.rel (%p1574) target = $region52
        $region51: #{tpu_custom_call.1} parent=47 // pred_region
          %s1578 = ssub.s32 128, 128
          %1579 = vsyncadd %s1570, %s1578
          %s1580 = smul.addr %s21, 2
          %s1581 = smul.addr %s1580, 64
          %s1582 = scalar_lea.hbm %s7, %s1581
          %s1584 = sshll.u32 %s1573, 4
          %s1585 = int_to_ptr.vmem [resolvable:$true] %s1584
          %1587 = dma.vmem_to_hbm [thread:$0]  %s1585, 128, %s1582, %s1570
        $region52: #{tpu_custom_call.1} parent=47 // pred_fallthru
          _
      $region48: #{tpu_custom_call.1} parent=5 // pred_fallthru
        _
      %p1588 = scmp.le.s32.totalorder 2, %s16
      // Predicated region
      $region53: #{tpu_custom_call.1} parent=5 // pred_check
        %p1589 = pneg %p1588
      $region54: #{tpu_custom_call.1} parent=5 // pred_check_branch
        %1591 = sbr.rel (%p1589) target = $region56
      $region55: #{tpu_custom_call.1} parent=5 // pred_region
        %s1592 = ssub.s32 %s16, 2
        // Predicated region
        $region57: #{tpu_custom_call.1} parent=55 // pred_check
          %p1593 = pneg %p197
        $region58: #{tpu_custom_call.1} parent=55 // pred_check_branch
          %1595 = sbr.rel (%p1593) target = $region60
        $region59: #{tpu_custom_call.1} parent=55 // pred_region
          %s1596 = sand.u32 %s182, 1
          %s1597 = scalar_lea.sflag [#allocation3], %s1596
          %s1598 = sand.u32 %s182, 1
          %s1599 = smul.addr %s1598, 8
          %s1600 = scalar_lea.vmem [#allocation2], %s1599
          %1601 = dma.done %s1597, 128
        $region60: #{tpu_custom_call.1} parent=55 // pred_fallthru
          _
      $region56: #{tpu_custom_call.1} parent=5 // pred_fallthru
        _
    $region6: #{tpu_custom_call.1} parent=1 // loop_footer
      %s20 = sadd.s32 1, %s16
    $region7: #{tpu_custom_call.1} parent=1 // loop_footer_branch
      %15 = sbr.rel target = $region3
    $region8: #{tpu_custom_call.1} parent=1 // loop_exit
      _
    %1602 = vsyncpa [#allocation3], 1
    %s1603 = scalar_lea.sflag [#allocation3], 1
    %1604 = vsyncpa %s1603, 1

</llo_original>
